<compile_context>
chip_gen: v5e
topology: v5e:2x2
jax: 0.10.0
libtpu: 0.0.40
codegen_flags: <defaults>
</compile_context>

<pallas_src>
import jax
import jax.numpy as jnp
from jax.experimental import pallas as pl


# ----------------------------- fused Pallas kernel ------------------------------

def _gennius_fused_kernel(
    # graph structure / raw features
    adj_dp_ref, adj_pd_ref, xd_ref, xp_ref,
    # encoder SAGEConv weights: <layer>_<edge type>  ('dp' updates protein, 'pd' updates drug)
    in_dp_wl, in_dp_wr, in_dp_b,
    in_pd_wl, in_pd_wr, in_pd_b,
    med_dp_wl, med_dp_wr, med_dp_b,
    med_pd_wl, med_pd_wr, med_pd_b,
    out_dp_wl, out_dp_wr, out_dp_b,
    out_pd_wl, out_pd_wr, out_pd_b,
    # decoder (EdgeClassifier)
    sel_d_ref, sel_p_ref, w1a_ref, w1b_ref, b1_ref, w2row_ref, b2_ref,
    # outputs
    zd_ref, zp_ref, logits_ref,
):
    f32, bf16 = jnp.float32, jnp.bfloat16

    def mm(a, b):
        # bf16 operands into the MXU, f32 accumulation.
        return jnp.dot(a.astype(bf16), b.astype(bf16), preferred_element_type=f32)

    adj_dp = adj_dp_ref[...]        # (Np, Nd)  bf16, 0/1 counts (exact)
    adj_pd = adj_pd_ref[...]        # (Nd, Np)  bf16

    def sage(adj, h_src, h_dst, wl_ref, wr_ref, b_ref, act):
        # SAGEConv(aggr='sum'), reassociated:  A @ (h_src @ W_l) + b + h_dst @ W_r  [+ tanh]
        msg = mm(h_src, wl_ref[...])                                  # (N_src, H)
        h = mm(adj, msg) + mm(h_dst, wr_ref[...]) + b_ref[...]        # f32 accum / f32 add
        return jnp.tanh(h) if act else h                              # f32 elementwise

    hd = xd_ref[...].astype(f32)
    hp = xp_ref[...].astype(f32)

    # conv_in + tanh    (Dropout == identity in eval mode)
    nhd = sage(adj_pd, hp, hd, in_pd_wl, in_pd_wr, in_pd_b, True)
    nhp = sage(adj_dp, hd, hp, in_dp_wl, in_dp_wr, in_dp_b, True)
    hd, hp = nhd, nhp
    # conv_med applied twice with shared weights (+ tanh each time)
    for _ in range(2):
        nhd = sage(adj_pd, hp, hd, med_pd_wl, med_pd_wr, med_pd_b, True)
        nhp = sage(adj_dp, hd, hp, med_dp_wl, med_dp_wr, med_dp_b, True)
        hd, hp = nhd, nhp
    # conv_out, no activation
    zd = sage(adj_pd, hp, hd, out_pd_wl, out_pd_wr, out_pd_b, False)
    zp = sage(adj_dp, hd, hp, out_dp_wl, out_dp_wr, out_dp_b, False)

    zd_ref[...] = zd.astype(zd_ref.dtype)
    zp_ref[...] = zp.astype(zp_ref.dtype)

    # ---------------- EdgeClassifier decoder (fused) ----------------
    # Endpoint gather as exact f32 one-hot matmuls (keeps embeddings un-rounded).
    zr = jnp.dot(sel_d_ref[...], zd, preferred_element_type=f32)      # (E, H) == zd[row]
    zc = jnp.dot(sel_p_ref[...], zp, preferred_element_type=f32)      # (E, H) == zp[col]
    # lin1 on concat([zr, zc]) == split matmul over the two halves, + relu (f32 VPU).
    h = mm(zr, w1a_ref[...]) + mm(zc, w1b_ref[...]) + b1_ref[...]
    h = jnp.maximum(h, 0.0)
    # lin2 (H -> 1): VPU multiply + lane reduction instead of a 1-column MXU matmul.
    logits = jnp.sum(h * w2row_ref[...], axis=-1, keepdims=True) + b2_ref[...]
    logits_ref[...] = logits.astype(logits_ref.dtype)


def gennius_forward_fused(adj_dp, adj_pd, xd, xp, params, sel_d, sel_p):
    nd, np_ = xd.shape[0], xp.shape[0]
    hidden = params['in_dp']['w_l'].shape[1]
    e = sel_d.shape[0]

    conv_args = []
    for name in ('in_dp', 'in_pd', 'med_dp', 'med_pd', 'out_dp', 'out_pd'):
        p = params[name]
        conv_args += [p['w_l'], p['w_r'], p['b']]
    dec = params['dec']
    dec_args = [sel_d, sel_p, dec['w1a'], dec['w1b'], dec['b1'], dec['w2row'], dec['b2']]

    out_shapes = (
        jax.ShapeDtypeStruct((nd, hidden), jnp.float32),
        jax.ShapeDtypeStruct((np_, hidden), jnp.float32),
        jax.ShapeDtypeStruct((e, 1), jnp.float32),
    )
    # Small single-block arrays: default whole-array VMEM blocks (no grid needed).
    return pl.pallas_call(
        _gennius_fused_kernel,
        out_shape=out_shapes,
    )(adj_dp, adj_pd, xd, xp, *conv_args, *dec_args)


# ------------------------------ parameters ---------------------------------

def init_params(key, f_drug, f_prot, hidden):
    """Deterministic synthetic weights matching the to_hetero(SAGEConv) shapes."""
    def lin(k, fan_in, fan_out):
        return jax.random.normal(k, (fan_in, fan_out), jnp.float32) / jnp.sqrt(
            jnp.float32(fan_in))

    keys = iter(jax.random.split(key, 32))
    params = {}
    # per-layer, per-hetero-edge-type SAGEConv weights:
    #   'dp' = ('drug','interaction','protein')      -> updates protein nodes
    #   'pd' = ('protein','rev_interaction','drug')  -> updates drug nodes
    dims = {
        'in_dp':  (f_drug, f_prot),   # (src_feat, dst_feat)
        'in_pd':  (f_prot, f_drug),
        'med_dp': (hidden, hidden),
        'med_pd': (hidden, hidden),
        'out_dp': (hidden, hidden),
        'out_pd': (hidden, hidden),
    }
    for name, (f_src, f_dst) in dims.items():
        params[name] = {
            'w_l': lin(next(keys), f_src, hidden),                    # neighbor proj (lin_l)
            'w_r': lin(next(keys), f_dst, hidden),                    # root proj (lin_r, no bias)
            'b':   jnp.full((1, hidden), 0.01, jnp.float32),          # lin_l bias
        }
    # EdgeClassifier: lin1 (2H -> H) split into drug / protein halves, lin2 (H -> 1)
    # lin2 weight stored transposed as a (1, H) row for the in-kernel VPU lane reduction.
    params['dec'] = {
        'w1a': lin(next(keys), hidden, hidden),
        'w1b': lin(next(keys), hidden, hidden),
        'b1':  jnp.full((1, hidden), 0.01, jnp.float32),
        'w2row': lin(next(keys), hidden, 1).reshape(1, hidden),
        'b2':  jnp.full((1, 1), 0.01, jnp.float32),
    }
    return params


# ------------------------------- forward -----------------------------------

def model_forward(params, x_dict, edge_index_dict, edge_label_index):
    xd = x_dict['drug']
    xp = x_dict['protein']
    nd, np_ = xd.shape[0], xp.shape[0]

    # Glue: dense (dst, src) adjacency from edge lists; small-integer counts are exact in
    # bf16, halving DMA bytes of the dominant operand. Duplicate edges accumulate, which
    # matches sum aggregation on a multigraph.
    ei_dp = edge_index_dict[('drug', 'interaction', 'protein')]
    ei_pd = edge_index_dict[('protein', 'rev_interaction', 'drug')]
    adj_dp = jnp.zeros((np_, nd), jnp.float32).at[ei_dp[1], ei_dp[0]].add(1.0)
    adj_pd = jnp.zeros((nd, np_), jnp.float32).at[ei_pd[1], ei_pd[0]].add(1.0)
    adj_dp = adj_dp.astype(jnp.bfloat16)
    adj_pd = adj_pd.astype(jnp.bfloat16)

    # Decoder endpoint selection as one-hot matrices; the gather itself runs in-kernel.
    row, col = edge_label_index[0], edge_label_index[1]
    sel_d = jax.nn.one_hot(row, nd, dtype=jnp.float32)     # (E, Nd)
    sel_p = jax.nn.one_hot(col, np_, dtype=jnp.float32)    # (E, Np)

    zd, zp, logits = gennius_forward_fused(adj_dp, adj_pd, xd, xp, params, sel_d, sel_p)
    z_dict = {'drug': zd, 'protein': zp}
    return z_dict, logits.reshape(-1)   # matches torch .view(-1)


# --------------------------------- main -------------------------------------

if __name__ == "__main__":
    H = 32            # hidden_channels
    Nd, Np = 8, 16    # drug / protein node counts
    Fd, Fp = 16, 24   # raw drug / protein feature dims
    E = 32            # interaction edges
    EL = 16           # edges to classify

    key = jax.random.PRNGKey(0)
    k = jax.random.split(key, 8)

    xd = jax.random.normal(k[0], (Nd, Fd), jnp.float32)
    xp = jax.random.normal(k[1], (Np, Fp), jnp.float32)
    drug_idx = jax.random.randint(k[2], (E,), 0, Nd)
    prot_idx = jax.random.randint(k[3], (E,), 0, Np)
    ei_dp = jnp.stack([drug_idx, prot_idx])          # (2, E)  drug -> protein
    ei_pd = jnp.stack([prot_idx, drug_idx])          # reverse edge type
    edge_label_index = jnp.stack([
        jax.random.randint(k[4], (EL,), 0, Nd),
        jax.random.randint(k[5], (EL,), 0, Np)])

    params = init_params(k[6], Fd, Fp, H)
    x_dict = {'drug': xd, 'protein': xp}
    edge_index_dict = {
        ('drug', 'interaction', 'protein'): ei_dp,
        ('protein', 'rev_interaction', 'drug'): ei_pd,
    }

    # TODO(synk): Dropout(p=0.2) is identity in eval mode; training-mode masking not emitted.
    z_dict, out = model_forward(params, x_dict, edge_index_dict, edge_label_index)
    jax.block_until_ready((z_dict, out))

    assert z_dict['drug'].shape == (Nd, H)
    assert z_dict['protein'].shape == (Np, H)
    assert out.shape == (EL,)
    print("KERNEL_OK")
</pallas_src>

<mosaic_0001>
module attributes {stable_mosaic.version = 11 : i64} {
  func.func @_gennius_fused_kernel(%arg0: memref<16x8xbf16, #tpu.memory_space<vmem>>, %arg1: memref<8x16xbf16, #tpu.memory_space<vmem>>, %arg2: memref<8x16xf32, #tpu.memory_space<vmem>>, %arg3: memref<16x24xf32, #tpu.memory_space<vmem>>, %arg4: memref<16x32xf32, #tpu.memory_space<vmem>>, %arg5: memref<24x32xf32, #tpu.memory_space<vmem>>, %arg6: memref<1x32xf32, #tpu.memory_space<vmem>>, %arg7: memref<24x32xf32, #tpu.memory_space<vmem>>, %arg8: memref<16x32xf32, #tpu.memory_space<vmem>>, %arg9: memref<1x32xf32, #tpu.memory_space<vmem>>, %arg10: memref<32x32xf32, #tpu.memory_space<vmem>>, %arg11: memref<32x32xf32, #tpu.memory_space<vmem>>, %arg12: memref<1x32xf32, #tpu.memory_space<vmem>>, %arg13: memref<32x32xf32, #tpu.memory_space<vmem>>, %arg14: memref<32x32xf32, #tpu.memory_space<vmem>>, %arg15: memref<1x32xf32, #tpu.memory_space<vmem>>, %arg16: memref<32x32xf32, #tpu.memory_space<vmem>>, %arg17: memref<32x32xf32, #tpu.memory_space<vmem>>, %arg18: memref<1x32xf32, #tpu.memory_space<vmem>>, %arg19: memref<32x32xf32, #tpu.memory_space<vmem>>, %arg20: memref<32x32xf32, #tpu.memory_space<vmem>>, %arg21: memref<1x32xf32, #tpu.memory_space<vmem>>, %arg22: memref<16x8xf32, #tpu.memory_space<vmem>>, %arg23: memref<16x16xf32, #tpu.memory_space<vmem>>, %arg24: memref<32x32xf32, #tpu.memory_space<vmem>>, %arg25: memref<32x32xf32, #tpu.memory_space<vmem>>, %arg26: memref<1x32xf32, #tpu.memory_space<vmem>>, %arg27: memref<1x32xf32, #tpu.memory_space<vmem>>, %arg28: memref<1x1xf32, #tpu.memory_space<vmem>>, %arg29: memref<8x32xf32, #tpu.memory_space<vmem>>, %arg30: memref<16x32xf32, #tpu.memory_space<vmem>>, %arg31: memref<16x1xf32, #tpu.memory_space<vmem>>) attributes {dimension_semantics = [], scalar_prefetch = 0 : i64, scratch_operands = 0 : i64, tpu.core_type = #tpu.core_type<tc>} {
    %c0 = arith.constant 0 : index
    %c0_0 = arith.constant 0 : index
    %0 = vector.load %arg0[%c0, %c0_0] : memref<16x8xbf16, #tpu.memory_space<vmem>>, vector<16x8xbf16>
    %c0_1 = arith.constant 0 : index
    %c0_2 = arith.constant 0 : index
    %1 = vector.load %arg1[%c0_1, %c0_2] : memref<8x16xbf16, #tpu.memory_space<vmem>>, vector<8x16xbf16>
    %c0_3 = arith.constant 0 : index
    %c0_4 = arith.constant 0 : index
    %2 = vector.load %arg2[%c0_3, %c0_4] : memref<8x16xf32, #tpu.memory_space<vmem>>, vector<8x16xf32>
    %c0_5 = arith.constant 0 : index
    %c0_6 = arith.constant 0 : index
    %3 = vector.load %arg3[%c0_5, %c0_6] : memref<16x24xf32, #tpu.memory_space<vmem>>, vector<16x24xf32>
    %c0_7 = arith.constant 0 : index
    %c0_8 = arith.constant 0 : index
    %4 = vector.load %arg7[%c0_7, %c0_8] : memref<24x32xf32, #tpu.memory_space<vmem>>, vector<24x32xf32>
    %5 = arith.truncf %3 : vector<16x24xf32> to vector<16x24xbf16>
    %6 = arith.truncf %4 : vector<24x32xf32> to vector<24x32xbf16>
    %cst = arith.constant dense<0.000000e+00> : vector<16x32xf32>
    %7 = tpu.matmul %5, %6, %cst {dimension_numbers = #tpu.dot_dimension_numbers<[1], [0], [0], [1], [0, 0, 1, 1], [], []>} : vector<16x24xbf16>, vector<24x32xbf16>, vector<16x32xf32> -> vector<16x32xf32>
    %8 = arith.truncf %7 : vector<16x32xf32> to vector<16x32xbf16>
    %cst_9 = arith.constant dense<0.000000e+00> : vector<8x32xf32>
    %9 = tpu.matmul %1, %8, %cst_9 {dimension_numbers = #tpu.dot_dimension_numbers<[1], [0], [0], [1], [0, 0, 1, 1], [], []>} : vector<8x16xbf16>, vector<16x32xbf16>, vector<8x32xf32> -> vector<8x32xf32>
    %c0_10 = arith.constant 0 : index
    %c0_11 = arith.constant 0 : index
    %10 = vector.load %arg8[%c0_10, %c0_11] : memref<16x32xf32, #tpu.memory_space<vmem>>, vector<16x32xf32>
    %11 = arith.truncf %2 : vector<8x16xf32> to vector<8x16xbf16>
    %12 = arith.truncf %10 : vector<16x32xf32> to vector<16x32xbf16>
    %cst_12 = arith.constant dense<0.000000e+00> : vector<8x32xf32>
    %13 = tpu.matmul %11, %12, %cst_12 {dimension_numbers = #tpu.dot_dimension_numbers<[1], [0], [0], [1], [0, 0, 1, 1], [], []>} : vector<8x16xbf16>, vector<16x32xbf16>, vector<8x32xf32> -> vector<8x32xf32>
    %14 = arith.addf %9, %13 : vector<8x32xf32>
    %c0_13 = arith.constant 0 : index
    %c0_14 = arith.constant 0 : index
    %15 = vector.load %arg9[%c0_13, %c0_14] : memref<1x32xf32, #tpu.memory_space<vmem>>, vector<1x32xf32>
    %16 = vector.broadcast %15 : vector<1x32xf32> to vector<8x32xf32>
    %17 = arith.addf %14, %16 : vector<8x32xf32>
    %18 = math.tanh %17 : vector<8x32xf32>
    %c0_15 = arith.constant 0 : index
    %c0_16 = arith.constant 0 : index
    %19 = vector.load %arg4[%c0_15, %c0_16] : memref<16x32xf32, #tpu.memory_space<vmem>>, vector<16x32xf32>
    %20 = arith.truncf %2 : vector<8x16xf32> to vector<8x16xbf16>
    %21 = arith.truncf %19 : vector<16x32xf32> to vector<16x32xbf16>
    %cst_17 = arith.constant dense<0.000000e+00> : vector<8x32xf32>
    %22 = tpu.matmul %20, %21, %cst_17 {dimension_numbers = #tpu.dot_dimension_numbers<[1], [0], [0], [1], [0, 0, 1, 1], [], []>} : vector<8x16xbf16>, vector<16x32xbf16>, vector<8x32xf32> -> vector<8x32xf32>
    %23 = arith.truncf %22 : vector<8x32xf32> to vector<8x32xbf16>
    %cst_18 = arith.constant dense<0.000000e+00> : vector<16x32xf32>
    %24 = tpu.matmul %0, %23, %cst_18 {dimension_numbers = #tpu.dot_dimension_numbers<[1], [0], [0], [1], [0, 0, 1, 1], [], []>} : vector<16x8xbf16>, vector<8x32xbf16>, vector<16x32xf32> -> vector<16x32xf32>
    %c0_19 = arith.constant 0 : index
    %c0_20 = arith.constant 0 : index
    %25 = vector.load %arg5[%c0_19, %c0_20] : memref<24x32xf32, #tpu.memory_space<vmem>>, vector<24x32xf32>
    %26 = arith.truncf %3 : vector<16x24xf32> to vector<16x24xbf16>
    %27 = arith.truncf %25 : vector<24x32xf32> to vector<24x32xbf16>
    %cst_21 = arith.constant dense<0.000000e+00> : vector<16x32xf32>
    %28 = tpu.matmul %26, %27, %cst_21 {dimension_numbers = #tpu.dot_dimension_numbers<[1], [0], [0], [1], [0, 0, 1, 1], [], []>} : vector<16x24xbf16>, vector<24x32xbf16>, vector<16x32xf32> -> vector<16x32xf32>
    %29 = arith.addf %24, %28 : vector<16x32xf32>
    %c0_22 = arith.constant 0 : index
    %c0_23 = arith.constant 0 : index
    %30 = vector.load %arg6[%c0_22, %c0_23] : memref<1x32xf32, #tpu.memory_space<vmem>>, vector<1x32xf32>
    %31 = vector.broadcast %30 : vector<1x32xf32> to vector<16x32xf32>
    %32 = arith.addf %29, %31 : vector<16x32xf32>
    %33 = math.tanh %32 : vector<16x32xf32>
    %c0_24 = arith.constant 0 : index
    %c0_25 = arith.constant 0 : index
    %34 = vector.load %arg13[%c0_24, %c0_25] : memref<32x32xf32, #tpu.memory_space<vmem>>, vector<32x32xf32>
    %35 = arith.truncf %33 : vector<16x32xf32> to vector<16x32xbf16>
    %36 = arith.truncf %34 : vector<32x32xf32> to vector<32x32xbf16>
    %cst_26 = arith.constant dense<0.000000e+00> : vector<16x32xf32>
    %37 = tpu.matmul %35, %36, %cst_26 {dimension_numbers = #tpu.dot_dimension_numbers<[1], [0], [0], [1], [0, 0, 1, 1], [], []>} : vector<16x32xbf16>, vector<32x32xbf16>, vector<16x32xf32> -> vector<16x32xf32>
    %38 = arith.truncf %37 : vector<16x32xf32> to vector<16x32xbf16>
    %cst_27 = arith.constant dense<0.000000e+00> : vector<8x32xf32>
    %39 = tpu.matmul %1, %38, %cst_27 {dimension_numbers = #tpu.dot_dimension_numbers<[1], [0], [0], [1], [0, 0, 1, 1], [], []>} : vector<8x16xbf16>, vector<16x32xbf16>, vector<8x32xf32> -> vector<8x32xf32>
    %c0_28 = arith.constant 0 : index
    %c0_29 = arith.constant 0 : index
    %40 = vector.load %arg14[%c0_28, %c0_29] : memref<32x32xf32, #tpu.memory_space<vmem>>, vector<32x32xf32>
    %41 = arith.truncf %18 : vector<8x32xf32> to vector<8x32xbf16>
    %42 = arith.truncf %40 : vector<32x32xf32> to vector<32x32xbf16>
    %cst_30 = arith.constant dense<0.000000e+00> : vector<8x32xf32>
    %43 = tpu.matmul %41, %42, %cst_30 {dimension_numbers = #tpu.dot_dimension_numbers<[1], [0], [0], [1], [0, 0, 1, 1], [], []>} : vector<8x32xbf16>, vector<32x32xbf16>, vector<8x32xf32> -> vector<8x32xf32>
    %44 = arith.addf %39, %43 : vector<8x32xf32>
    %c0_31 = arith.constant 0 : index
    %c0_32 = arith.constant 0 : index
    %45 = vector.load %arg15[%c0_31, %c0_32] : memref<1x32xf32, #tpu.memory_space<vmem>>, vector<1x32xf32>
    %46 = vector.broadcast %45 : vector<1x32xf32> to vector<8x32xf32>
    %47 = arith.addf %44, %46 : vector<8x32xf32>
    %48 = math.tanh %47 : vector<8x32xf32>
    %c0_33 = arith.constant 0 : index
    %c0_34 = arith.constant 0 : index
    %49 = vector.load %arg10[%c0_33, %c0_34] : memref<32x32xf32, #tpu.memory_space<vmem>>, vector<32x32xf32>
    %50 = arith.truncf %18 : vector<8x32xf32> to vector<8x32xbf16>
    %51 = arith.truncf %49 : vector<32x32xf32> to vector<32x32xbf16>
    %cst_35 = arith.constant dense<0.000000e+00> : vector<8x32xf32>
    %52 = tpu.matmul %50, %51, %cst_35 {dimension_numbers = #tpu.dot_dimension_numbers<[1], [0], [0], [1], [0, 0, 1, 1], [], []>} : vector<8x32xbf16>, vector<32x32xbf16>, vector<8x32xf32> -> vector<8x32xf32>
    %53 = arith.truncf %52 : vector<8x32xf32> to vector<8x32xbf16>
    %cst_36 = arith.constant dense<0.000000e+00> : vector<16x32xf32>
    %54 = tpu.matmul %0, %53, %cst_36 {dimension_numbers = #tpu.dot_dimension_numbers<[1], [0], [0], [1], [0, 0, 1, 1], [], []>} : vector<16x8xbf16>, vector<8x32xbf16>, vector<16x32xf32> -> vector<16x32xf32>
    %c0_37 = arith.constant 0 : index
    %c0_38 = arith.constant 0 : index
    %55 = vector.load %arg11[%c0_37, %c0_38] : memref<32x32xf32, #tpu.memory_space<vmem>>, vector<32x32xf32>
    %56 = arith.truncf %33 : vector<16x32xf32> to vector<16x32xbf16>
    %57 = arith.truncf %55 : vector<32x32xf32> to vector<32x32xbf16>
    %cst_39 = arith.constant dense<0.000000e+00> : vector<16x32xf32>
    %58 = tpu.matmul %56, %57, %cst_39 {dimension_numbers = #tpu.dot_dimension_numbers<[1], [0], [0], [1], [0, 0, 1, 1], [], []>} : vector<16x32xbf16>, vector<32x32xbf16>, vector<16x32xf32> -> vector<16x32xf32>
    %59 = arith.addf %54, %58 : vector<16x32xf32>
    %c0_40 = arith.constant 0 : index
    %c0_41 = arith.constant 0 : index
    %60 = vector.load %arg12[%c0_40, %c0_41] : memref<1x32xf32, #tpu.memory_space<vmem>>, vector<1x32xf32>
    %61 = vector.broadcast %60 : vector<1x32xf32> to vector<16x32xf32>
    %62 = arith.addf %59, %61 : vector<16x32xf32>
    %63 = math.tanh %62 : vector<16x32xf32>
    %c0_42 = arith.constant 0 : index
    %c0_43 = arith.constant 0 : index
    %64 = vector.load %arg13[%c0_42, %c0_43] : memref<32x32xf32, #tpu.memory_space<vmem>>, vector<32x32xf32>
    %65 = arith.truncf %63 : vector<16x32xf32> to vector<16x32xbf16>
    %66 = arith.truncf %64 : vector<32x32xf32> to vector<32x32xbf16>
    %cst_44 = arith.constant dense<0.000000e+00> : vector<16x32xf32>
    %67 = tpu.matmul %65, %66, %cst_44 {dimension_numbers = #tpu.dot_dimension_numbers<[1], [0], [0], [1], [0, 0, 1, 1], [], []>} : vector<16x32xbf16>, vector<32x32xbf16>, vector<16x32xf32> -> vector<16x32xf32>
    %68 = arith.truncf %67 : vector<16x32xf32> to vector<16x32xbf16>
    %cst_45 = arith.constant dense<0.000000e+00> : vector<8x32xf32>
    %69 = tpu.matmul %1, %68, %cst_45 {dimension_numbers = #tpu.dot_dimension_numbers<[1], [0], [0], [1], [0, 0, 1, 1], [], []>} : vector<8x16xbf16>, vector<16x32xbf16>, vector<8x32xf32> -> vector<8x32xf32>
    %c0_46 = arith.constant 0 : index
    %c0_47 = arith.constant 0 : index
    %70 = vector.load %arg14[%c0_46, %c0_47] : memref<32x32xf32, #tpu.memory_space<vmem>>, vector<32x32xf32>
    %71 = arith.truncf %48 : vector<8x32xf32> to vector<8x32xbf16>
    %72 = arith.truncf %70 : vector<32x32xf32> to vector<32x32xbf16>
    %cst_48 = arith.constant dense<0.000000e+00> : vector<8x32xf32>
    %73 = tpu.matmul %71, %72, %cst_48 {dimension_numbers = #tpu.dot_dimension_numbers<[1], [0], [0], [1], [0, 0, 1, 1], [], []>} : vector<8x32xbf16>, vector<32x32xbf16>, vector<8x32xf32> -> vector<8x32xf32>
    %74 = arith.addf %69, %73 : vector<8x32xf32>
    %c0_49 = arith.constant 0 : index
    %c0_50 = arith.constant 0 : index
    %75 = vector.load %arg15[%c0_49, %c0_50] : memref<1x32xf32, #tpu.memory_space<vmem>>, vector<1x32xf32>
    %76 = vector.broadcast %75 : vector<1x32xf32> to vector<8x32xf32>
    %77 = arith.addf %74, %76 : vector<8x32xf32>
    %78 = math.tanh %77 : vector<8x32xf32>
    %c0_51 = arith.constant 0 : index
    %c0_52 = arith.constant 0 : index
    %79 = vector.load %arg10[%c0_51, %c0_52] : memref<32x32xf32, #tpu.memory_space<vmem>>, vector<32x32xf32>
    %80 = arith.truncf %48 : vector<8x32xf32> to vector<8x32xbf16>
    %81 = arith.truncf %79 : vector<32x32xf32> to vector<32x32xbf16>
    %cst_53 = arith.constant dense<0.000000e+00> : vector<8x32xf32>
    %82 = tpu.matmul %80, %81, %cst_53 {dimension_numbers = #tpu.dot_dimension_numbers<[1], [0], [0], [1], [0, 0, 1, 1], [], []>} : vector<8x32xbf16>, vector<32x32xbf16>, vector<8x32xf32> -> vector<8x32xf32>
    %83 = arith.truncf %82 : vector<8x32xf32> to vector<8x32xbf16>
    %cst_54 = arith.constant dense<0.000000e+00> : vector<16x32xf32>
    %84 = tpu.matmul %0, %83, %cst_54 {dimension_numbers = #tpu.dot_dimension_numbers<[1], [0], [0], [1], [0, 0, 1, 1], [], []>} : vector<16x8xbf16>, vector<8x32xbf16>, vector<16x32xf32> -> vector<16x32xf32>
    %c0_55 = arith.constant 0 : index
    %c0_56 = arith.constant 0 : index
    %85 = vector.load %arg11[%c0_55, %c0_56] : memref<32x32xf32, #tpu.memory_space<vmem>>, vector<32x32xf32>
    %86 = arith.truncf %63 : vector<16x32xf32> to vector<16x32xbf16>
    %87 = arith.truncf %85 : vector<32x32xf32> to vector<32x32xbf16>
    %cst_57 = arith.constant dense<0.000000e+00> : vector<16x32xf32>
    %88 = tpu.matmul %86, %87, %cst_57 {dimension_numbers = #tpu.dot_dimension_numbers<[1], [0], [0], [1], [0, 0, 1, 1], [], []>} : vector<16x32xbf16>, vector<32x32xbf16>, vector<16x32xf32> -> vector<16x32xf32>
    %89 = arith.addf %84, %88 : vector<16x32xf32>
    %c0_58 = arith.constant 0 : index
    %c0_59 = arith.constant 0 : index
    %90 = vector.load %arg12[%c0_58, %c0_59] : memref<1x32xf32, #tpu.memory_space<vmem>>, vector<1x32xf32>
    %91 = vector.broadcast %90 : vector<1x32xf32> to vector<16x32xf32>
    %92 = arith.addf %89, %91 : vector<16x32xf32>
    %93 = math.tanh %92 : vector<16x32xf32>
    %c0_60 = arith.constant 0 : index
    %c0_61 = arith.constant 0 : index
    %94 = vector.load %arg19[%c0_60, %c0_61] : memref<32x32xf32, #tpu.memory_space<vmem>>, vector<32x32xf32>
    %95 = arith.truncf %93 : vector<16x32xf32> to vector<16x32xbf16>
    %96 = arith.truncf %94 : vector<32x32xf32> to vector<32x32xbf16>
    %cst_62 = arith.constant dense<0.000000e+00> : vector<16x32xf32>
    %97 = tpu.matmul %95, %96, %cst_62 {dimension_numbers = #tpu.dot_dimension_numbers<[1], [0], [0], [1], [0, 0, 1, 1], [], []>} : vector<16x32xbf16>, vector<32x32xbf16>, vector<16x32xf32> -> vector<16x32xf32>
    %98 = arith.truncf %97 : vector<16x32xf32> to vector<16x32xbf16>
    %cst_63 = arith.constant dense<0.000000e+00> : vector<8x32xf32>
    %99 = tpu.matmul %1, %98, %cst_63 {dimension_numbers = #tpu.dot_dimension_numbers<[1], [0], [0], [1], [0, 0, 1, 1], [], []>} : vector<8x16xbf16>, vector<16x32xbf16>, vector<8x32xf32> -> vector<8x32xf32>
    %c0_64 = arith.constant 0 : index
    %c0_65 = arith.constant 0 : index
    %100 = vector.load %arg20[%c0_64, %c0_65] : memref<32x32xf32, #tpu.memory_space<vmem>>, vector<32x32xf32>
    %101 = arith.truncf %78 : vector<8x32xf32> to vector<8x32xbf16>
    %102 = arith.truncf %100 : vector<32x32xf32> to vector<32x32xbf16>
    %cst_66 = arith.constant dense<0.000000e+00> : vector<8x32xf32>
    %103 = tpu.matmul %101, %102, %cst_66 {dimension_numbers = #tpu.dot_dimension_numbers<[1], [0], [0], [1], [0, 0, 1, 1], [], []>} : vector<8x32xbf16>, vector<32x32xbf16>, vector<8x32xf32> -> vector<8x32xf32>
    %104 = arith.addf %99, %103 : vector<8x32xf32>
    %c0_67 = arith.constant 0 : index
    %c0_68 = arith.constant 0 : index
    %105 = vector.load %arg21[%c0_67, %c0_68] : memref<1x32xf32, #tpu.memory_space<vmem>>, vector<1x32xf32>
    %106 = vector.broadcast %105 : vector<1x32xf32> to vector<8x32xf32>
    %107 = arith.addf %104, %106 : vector<8x32xf32>
    %c0_69 = arith.constant 0 : index
    %c0_70 = arith.constant 0 : index
    %108 = vector.load %arg16[%c0_69, %c0_70] : memref<32x32xf32, #tpu.memory_space<vmem>>, vector<32x32xf32>
    %109 = arith.truncf %78 : vector<8x32xf32> to vector<8x32xbf16>
    %110 = arith.truncf %108 : vector<32x32xf32> to vector<32x32xbf16>
    %cst_71 = arith.constant dense<0.000000e+00> : vector<8x32xf32>
    %111 = tpu.matmul %109, %110, %cst_71 {dimension_numbers = #tpu.dot_dimension_numbers<[1], [0], [0], [1], [0, 0, 1, 1], [], []>} : vector<8x32xbf16>, vector<32x32xbf16>, vector<8x32xf32> -> vector<8x32xf32>
    %112 = arith.truncf %111 : vector<8x32xf32> to vector<8x32xbf16>
    %cst_72 = arith.constant dense<0.000000e+00> : vector<16x32xf32>
    %113 = tpu.matmul %0, %112, %cst_72 {dimension_numbers = #tpu.dot_dimension_numbers<[1], [0], [0], [1], [0, 0, 1, 1], [], []>} : vector<16x8xbf16>, vector<8x32xbf16>, vector<16x32xf32> -> vector<16x32xf32>
    %c0_73 = arith.constant 0 : index
    %c0_74 = arith.constant 0 : index
    %114 = vector.load %arg17[%c0_73, %c0_74] : memref<32x32xf32, #tpu.memory_space<vmem>>, vector<32x32xf32>
    %115 = arith.truncf %93 : vector<16x32xf32> to vector<16x32xbf16>
    %116 = arith.truncf %114 : vector<32x32xf32> to vector<32x32xbf16>
    %cst_75 = arith.constant dense<0.000000e+00> : vector<16x32xf32>
    %117 = tpu.matmul %115, %116, %cst_75 {dimension_numbers = #tpu.dot_dimension_numbers<[1], [0], [0], [1], [0, 0, 1, 1], [], []>} : vector<16x32xbf16>, vector<32x32xbf16>, vector<16x32xf32> -> vector<16x32xf32>
    %118 = arith.addf %113, %117 : vector<16x32xf32>
    %c0_76 = arith.constant 0 : index
    %c0_77 = arith.constant 0 : index
    %119 = vector.load %arg18[%c0_76, %c0_77] : memref<1x32xf32, #tpu.memory_space<vmem>>, vector<1x32xf32>
    %120 = vector.broadcast %119 : vector<1x32xf32> to vector<16x32xf32>
    %121 = arith.addf %118, %120 : vector<16x32xf32>
    %c0_78 = arith.constant 0 : index
    %c0_79 = arith.constant 0 : index
    %122 = vector.load %arg29[%c0_78, %c0_79] : memref<8x32xf32, #tpu.memory_space<vmem>>, vector<8x32xf32>
    tpu.vector_store %arg29[%c0_78, %c0_79], %107 {strides = array<i32>} : memref<8x32xf32, #tpu.memory_space<vmem>>, vector<8x32xf32>,
    %c0_80 = arith.constant 0 : index
    %c0_81 = arith.constant 0 : index
    %123 = vector.load %arg30[%c0_80, %c0_81] : memref<16x32xf32, #tpu.memory_space<vmem>>, vector<16x32xf32>
    tpu.vector_store %arg30[%c0_80, %c0_81], %121 {strides = array<i32>} : memref<16x32xf32, #tpu.memory_space<vmem>>, vector<16x32xf32>,
    %c0_82 = arith.constant 0 : index
    %c0_83 = arith.constant 0 : index
    %124 = vector.load %arg22[%c0_82, %c0_83] : memref<16x8xf32, #tpu.memory_space<vmem>>, vector<16x8xf32>
    %cst_84 = arith.constant dense<0.000000e+00> : vector<16x32xf32>
    %125 = tpu.matmul %124, %107, %cst_84 {dimension_numbers = #tpu.dot_dimension_numbers<[1], [0], [0], [1], [0, 0, 1, 1], [], []>} : vector<16x8xf32>, vector<8x32xf32>, vector<16x32xf32> -> vector<16x32xf32>
    %c0_85 = arith.constant 0 : index
    %c0_86 = arith.constant 0 : index
    %126 = vector.load %arg23[%c0_85, %c0_86] : memref<16x16xf32, #tpu.memory_space<vmem>>, vector<16x16xf32>
    %cst_87 = arith.constant dense<0.000000e+00> : vector<16x32xf32>
    %127 = tpu.matmul %126, %121, %cst_87 {dimension_numbers = #tpu.dot_dimension_numbers<[1], [0], [0], [1], [0, 0, 1, 1], [], []>} : vector<16x16xf32>, vector<16x32xf32>, vector<16x32xf32> -> vector<16x32xf32>
    %c0_88 = arith.constant 0 : index
    %c0_89 = arith.constant 0 : index
    %128 = vector.load %arg24[%c0_88, %c0_89] : memref<32x32xf32, #tpu.memory_space<vmem>>, vector<32x32xf32>
    %129 = arith.truncf %125 : vector<16x32xf32> to vector<16x32xbf16>
    %130 = arith.truncf %128 : vector<32x32xf32> to vector<32x32xbf16>
    %cst_90 = arith.constant dense<0.000000e+00> : vector<16x32xf32>
    %131 = tpu.matmul %129, %130, %cst_90 {dimension_numbers = #tpu.dot_dimension_numbers<[1], [0], [0], [1], [0, 0, 1, 1], [], []>} : vector<16x32xbf16>, vector<32x32xbf16>, vector<16x32xf32> -> vector<16x32xf32>
    %c0_91 = arith.constant 0 : index
    %c0_92 = arith.constant 0 : index
    %132 = vector.load %arg25[%c0_91, %c0_92] : memref<32x32xf32, #tpu.memory_space<vmem>>, vector<32x32xf32>
    %133 = arith.truncf %127 : vector<16x32xf32> to vector<16x32xbf16>
    %134 = arith.truncf %132 : vector<32x32xf32> to vector<32x32xbf16>
    %cst_93 = arith.constant dense<0.000000e+00> : vector<16x32xf32>
    %135 = tpu.matmul %133, %134, %cst_93 {dimension_numbers = #tpu.dot_dimension_numbers<[1], [0], [0], [1], [0, 0, 1, 1], [], []>} : vector<16x32xbf16>, vector<32x32xbf16>, vector<16x32xf32> -> vector<16x32xf32>
    %136 = arith.addf %131, %135 : vector<16x32xf32>
    %c0_94 = arith.constant 0 : index
    %c0_95 = arith.constant 0 : index
    %137 = vector.load %arg26[%c0_94, %c0_95] : memref<1x32xf32, #tpu.memory_space<vmem>>, vector<1x32xf32>
    %138 = vector.broadcast %137 : vector<1x32xf32> to vector<16x32xf32>
    %139 = arith.addf %136, %138 : vector<16x32xf32>
    %cst_96 = arith.constant 0.000000e+00 : f32
    %140 = vector.broadcast %cst_96 : f32 to vector<16x32xf32>
    %141 = arith.maximumf %139, %140 : vector<16x32xf32>
    %c0_97 = arith.constant 0 : index
    %c0_98 = arith.constant 0 : index
    %142 = vector.load %arg27[%c0_97, %c0_98] : memref<1x32xf32, #tpu.memory_space<vmem>>, vector<1x32xf32>
    %143 = vector.broadcast %142 : vector<1x32xf32> to vector<16x32xf32>
    %144 = arith.mulf %141, %143 : vector<16x32xf32>
    %cst_99 = arith.constant dense<0.000000e+00> : vector<16xf32>
    %145 = vector.multi_reduction <add>, %144, %cst_99 [1] : vector<16x32xf32> to vector<16xf32>
    %146 = vector.shape_cast %145 : vector<16xf32> to vector<16x1xf32>
    %c0_100 = arith.constant 0 : index
    %c0_101 = arith.constant 0 : index
    %147 = vector.load %arg28[%c0_100, %c0_101] : memref<1x1xf32, #tpu.memory_space<vmem>>, vector<1x1xf32>
    %148 = vector.broadcast %147 : vector<1x1xf32> to vector<16x1xf32>
    %149 = arith.addf %146, %148 : vector<16x1xf32>
    %c0_102 = arith.constant 0 : index
    %c0_103 = arith.constant 0 : index
    %150 = vector.load %arg31[%c0_102, %c0_103] : memref<16x1xf32, #tpu.memory_space<vmem>>, vector<16x1xf32>
    tpu.vector_store %arg31[%c0_102, %c0_103], %149 {strides = array<i32>} : memref<16x1xf32, #tpu.memory_space<vmem>>, vector<16x1xf32>,
    return
  }
}

</mosaic_0001>

<llo_original>
// kernel: tpu_custom_call.1
$region0: #{tpu_custom_call.1}
  #allocation0 [shape = 'u32[]', space=smem, size = 0x4, offset = 0x4, fixed_abs, tag = 'smem constant byte address 0x4 - core index']
  #allocation1 [shape = 'u32[72,128]{1,0:T(1,128)}', space=vmem, size = 0x9000, scoped, tag = 'internal scratch']
  #allocation2 [shape = 'f32[1,1]{1,0:T(1,128)S(1)}', space=vmem, size = 0x200, scoped, tag = 'scoped memory for tpu_custom_call.1']
  %s0 = inlined_call_operand.smem [shape: u32[32], index: -1, kind: input, shape index: {}]
  %s1 = sld [smem:[%s0]]
  %s2 = scalar_lea.smem %s0, 1
  %s3 = sld [smem:[%s2]]
  %s4 = scalar_lea.smem %s0, 2
  %s5 = sld [smem:[%s4]]
  %s6 = scalar_lea.smem %s0, 3
  %s7 = sld [smem:[%s6]]
  %s8 = scalar_lea.smem %s0, 4
  %s9 = sld [smem:[%s8]]
  %s10 = scalar_lea.smem %s0, 5
  %s11 = sld [smem:[%s10]]
  %s12 = scalar_lea.smem %s0, 6
  %s13 = sld [smem:[%s12]]
  %s14 = scalar_lea.smem %s0, 7
  %s15 = sld [smem:[%s14]]
  %s16 = scalar_lea.smem %s0, 8
  %s17 = sld [smem:[%s16]]
  %s18 = scalar_lea.smem %s0, 9
  %s19 = sld [smem:[%s18]]
  %s20 = scalar_lea.smem %s0, 10
  %s21 = sld [smem:[%s20]]
  %s22 = scalar_lea.smem %s0, 11
  %s23 = sld [smem:[%s22]]
  %s24 = scalar_lea.smem %s0, 12
  %s25 = sld [smem:[%s24]]
  %s26 = scalar_lea.smem %s0, 13
  %s27 = sld [smem:[%s26]]
  %s28 = scalar_lea.smem %s0, 14
  %s29 = sld [smem:[%s28]]
  %s30 = scalar_lea.smem %s0, 15
  %s31 = sld [smem:[%s30]]
  %s32 = scalar_lea.smem %s0, 16
  %s33 = sld [smem:[%s32]]
  %s34 = scalar_lea.smem %s0, 17
  %s35 = sld [smem:[%s34]]
  %s36 = scalar_lea.smem %s0, 18
  %s37 = sld [smem:[%s36]]
  %s38 = scalar_lea.smem %s0, 19
  %s39 = sld [smem:[%s38]]
  %s40 = scalar_lea.smem %s0, 20
  %s41 = sld [smem:[%s40]]
  %s42 = scalar_lea.smem %s0, 21
  %s43 = sld [smem:[%s42]]
  %s44 = scalar_lea.smem %s0, 22
  %s45 = sld [smem:[%s44]]
  %s46 = scalar_lea.smem %s0, 23
  %s47 = sld [smem:[%s46]]
  %s48 = scalar_lea.smem %s0, 24
  %s49 = sld [smem:[%s48]]
  %s50 = scalar_lea.smem %s0, 25
  %s51 = sld [smem:[%s50]]
  %s52 = scalar_lea.smem %s0, 26
  %s53 = sld [smem:[%s52]]
  %s54 = scalar_lea.smem %s0, 27
  %s55 = sld [smem:[%s54]]
  %s56 = scalar_lea.smem %s0, 28
  %s57 = sld [smem:[%s56]]
  %s58 = scalar_lea.smem %s0, 29
  %s59 = sld [smem:[%s58]]
  %s60 = scalar_lea.smem %s0, 30
  %s61 = sld [smem:[%s60]]
  %s62 = scalar_lea.smem %s0, 31
  %s63 = sld [smem:[%s62]]
  %64 = xla_tuple %s59, %s61, %s63
  %s65 = sld [smem:[#allocation0]]
  $region214: #{tpu_custom_call.1} parent=0
    _
  %s67 = ssub.s32 1, %s65
  %s68 = scalar_select 0, %s67, %s65
  %v69 = vstv %s57
  %70 = vst [vmem:[#allocation2] sm:$0x1] %v69
  $region1: #{tpu_custom_call.1} parent=0
    #allocation3 [shape = 'u8[2048]{0}', space=vmem, size = 0x800, scoped, tag = 'input window, operand 1, single buffered']
    #allocation4 [shape = 's32[1]{0}', space=sflag, size = 0x4, scoped, tag = 'scoped memory for tpu_custom_call.1']
    #allocation5 [shape = 's32[1]{0}', space=sflag, size = 0x4, scoped, tag = 'scoped memory for tpu_custom_call.1']
    #allocation6 [shape = 'u8[4096]{0}', space=vmem, size = 0x1000, scoped, tag = 'input window, operand 2, single buffered']
    #allocation7 [shape = 's32[1]{0}', space=sflag, size = 0x4, scoped, tag = 'scoped memory for tpu_custom_call.1']
    #allocation8 [shape = 'u8[8192]{0}', space=vmem, size = 0x2000, scoped, tag = 'input window, operand 3, single buffered']
    #allocation9 [shape = 'u8[8192]{0}', space=vmem, size = 0x2000, scoped, tag = 'input window, operand 4, single buffered']
    #allocation10 [shape = 's32[1]{0}', space=sflag, size = 0x4, scoped, tag = 'scoped memory for tpu_custom_call.1']
    #allocation11 [shape = 'u8[512]{0}', space=vmem, size = 0x400, scoped, tag = 'input window, operand 6, single buffered']
    #allocation12 [shape = 'u8[12288]{0}', space=vmem, size = 0x3000, scoped, tag = 'input window, operand 7, single buffered']
    #allocation13 [shape = 's32[1]{0}', space=sflag, size = 0x4, scoped, tag = 'scoped memory for tpu_custom_call.1']
    #allocation14 [shape = 'u8[8192]{0}', space=vmem, size = 0x2000, scoped, tag = 'input window, operand 8, single buffered']
    #allocation15 [shape = 'u8[512]{0}', space=vmem, size = 0x400, scoped, tag = 'input window, operand 9, single buffered']
    #allocation16 [shape = 's32[1]{0}', space=sflag, size = 0x4, scoped, tag = 'scoped memory for tpu_custom_call.1']
    #allocation17 [shape = 'u8[16384]{0}', space=vmem, size = 0x4000, scoped, tag = 'input window, operand 10, single buffered']
    #allocation18 [shape = 'u8[16384]{0}', space=vmem, size = 0x4000, scoped, tag = 'input window, operand 11, single buffered']
    #allocation19 [shape = 's32[1]{0}', space=sflag, size = 0x4, scoped, tag = 'scoped memory for tpu_custom_call.1']
    #allocation20 [shape = 'u8[16384]{0}', space=vmem, size = 0x4000, scoped, tag = 'input window, operand 13, single buffered']
    #allocation21 [shape = 'u8[16384]{0}', space=vmem, size = 0x4000, scoped, tag = 'input window, operand 14, single buffered']
    #allocation22 [shape = 's32[1]{0}', space=sflag, size = 0x4, scoped, tag = 'scoped memory for tpu_custom_call.1']
    #allocation23 [shape = 'u8[16384]{0}', space=vmem, size = 0x4000, scoped, tag = 'input window, operand 16, single buffered']
    #allocation24 [shape = 'u8[16384]{0}', space=vmem, size = 0x4000, scoped, tag = 'input window, operand 17, single buffered']
    #allocation25 [shape = 's32[1]{0}', space=sflag, size = 0x4, scoped, tag = 'scoped memory for tpu_custom_call.1']
    #allocation26 [shape = 'u8[16384]{0}', space=vmem, size = 0x4000, scoped, tag = 'input window, operand 19, single buffered']
    #allocation27 [shape = 'u8[16384]{0}', space=vmem, size = 0x4000, scoped, tag = 'input window, operand 20, single buffered']
    #allocation28 [shape = 's32[1]{0}', space=sflag, size = 0x4, scoped, tag = 'scoped memory for tpu_custom_call.1']
    #allocation29 [shape = 'u8[16384]{0}', space=vmem, size = 0x4000, scoped, tag = 'input window, operand 24, single buffered']
    #allocation30 [shape = 'u8[16384]{0}', space=vmem, size = 0x4000, scoped, tag = 'input window, operand 25, single buffered']
    #allocation31 [shape = 's32[1]{0}', space=sflag, size = 0x4, scoped, tag = 'scoped memory for tpu_custom_call.1']
    #allocation32 [shape = 'u8[4096]{0}', space=vmem, size = 0x1000, scoped, tag = 'output window, operand 0, single buffered']
    #allocation33 [shape = 'u8[8192]{0}', space=vmem, size = 0x2000, scoped, tag = 'output window, operand 1, single buffered']
    #allocation34 [shape = 's32[1]{0}', space=sflag, size = 0x4, scoped, tag = 'scoped memory for tpu_custom_call.1']
    %71 = vsyncpa [#allocation4], 0
    %72 = vsyncpa [#allocation7], 0
    %73 = vsyncpa [#allocation10], 0
    %74 = vsyncpa [#allocation13], 0
    %75 = vsyncpa [#allocation16], 0
    %76 = vsyncpa [#allocation19], 0
    %77 = vsyncpa [#allocation22], 0
    %78 = vsyncpa [#allocation25], 0
    %79 = vsyncpa [#allocation28], 0
    %80 = vsyncpa [#allocation31], 0
    %81 = vsyncpa [#allocation5], 0
    %82 = vsyncpa [#allocation34], 0
    // Predicated region
    $region2: #{tpu_custom_call.1} parent=1 // pred_check
      _
    $region3: #{tpu_custom_call.1} parent=1 // pred_check_branch
      %84 = sbr.rel (0) target = $region5
    $region4: #{tpu_custom_call.1} parent=1 // pred_region
      _
    $region5: #{tpu_custom_call.1} parent=1 // pred_fallthru
      _
    // Predicated region
    $region6: #{tpu_custom_call.1} parent=1 // pred_check
      _
    $region7: #{tpu_custom_call.1} parent=1 // pred_check_branch
      %86 = sbr.rel (0) target = $region9
    $region8: #{tpu_custom_call.1} parent=1 // pred_region
      %88 = vsyncadd [#allocation4], 0
      %s90 = sshll.u32 %s3, 4
      %s91 = int_to_ptr.hbm [resolvable:$true] %s90
      %s92 = sshll.u32 [#allocation3], 4
      %s93 = int_to_ptr.vmem [resolvable:$true] %s92
      %95 = dma.hbm_to_vmem [thread:$0]  %s91, 64, %s93, [#allocation4]
    $region9: #{tpu_custom_call.1} parent=1 // pred_fallthru
      _
    // Predicated region
    $region10: #{tpu_custom_call.1} parent=1 // pred_check
      _
    $region11: #{tpu_custom_call.1} parent=1 // pred_check_branch
      %97 = sbr.rel (0) target = $region13
    $region12: #{tpu_custom_call.1} parent=1 // pred_region
      %99 = vsyncadd [#allocation7], 0
      %s101 = sshll.u32 %s5, 4
      %s102 = int_to_ptr.hbm [resolvable:$true] %s101
      %s103 = sshll.u32 [#allocation6], 4
      %s104 = int_to_ptr.vmem [resolvable:$true] %s103
      %106 = dma.hbm_to_vmem [thread:$0]  %s102, 128, %s104, [#allocation7]
    $region13: #{tpu_custom_call.1} parent=1 // pred_fallthru
      _
    // Predicated region
    $region14: #{tpu_custom_call.1} parent=1 // pred_check
      _
    $region15: #{tpu_custom_call.1} parent=1 // pred_check_branch
      %108 = sbr.rel (0) target = $region17
    $region16: #{tpu_custom_call.1} parent=1 // pred_region
      %110 = vsyncadd [#allocation7], 0
      %s111 = sshll.u32 %s7, 4
      %s112 = int_to_ptr.hbm [resolvable:$true] %s111
      %s113 = sshll.u32 [#allocation8], 4
      %s114 = int_to_ptr.vmem [resolvable:$true] %s113
      %119 = dma.hbm_to_vmem [thread:$0]  %s112, 256, %s114, [#allocation7], 128, 128, 8
    $region17: #{tpu_custom_call.1} parent=1 // pred_fallthru
      _
    // Predicated region
    $region18: #{tpu_custom_call.1} parent=1 // pred_check
      _
    $region19: #{tpu_custom_call.1} parent=1 // pred_check_branch
      %121 = sbr.rel (0) target = $region21
    $region20: #{tpu_custom_call.1} parent=1 // pred_region
      %123 = vsyncadd [#allocation10], 0
      %s124 = sshll.u32 %s9, 4
      %s125 = int_to_ptr.hbm [resolvable:$true] %s124
      %s126 = sshll.u32 [#allocation9], 4
      %s127 = int_to_ptr.vmem [resolvable:$true] %s126
      %132 = dma.hbm_to_vmem [thread:$0]  %s125, 256, %s127, [#allocation10], 128, 128, 8
    $region21: #{tpu_custom_call.1} parent=1 // pred_fallthru
      _
    // Predicated region
    $region22: #{tpu_custom_call.1} parent=1 // pred_check
      _
    $region23: #{tpu_custom_call.1} parent=1 // pred_check_branch
      %134 = sbr.rel (0) target = $region25
    $region24: #{tpu_custom_call.1} parent=1 // pred_region
      _
    $region25: #{tpu_custom_call.1} parent=1 // pred_fallthru
      _
    // Predicated region
    $region26: #{tpu_custom_call.1} parent=1 // pred_check
      _
    $region27: #{tpu_custom_call.1} parent=1 // pred_check_branch
      %136 = sbr.rel (0) target = $region29
    $region28: #{tpu_custom_call.1} parent=1 // pred_region
      %138 = vsyncadd [#allocation10], 0
      %s140 = sshll.u32 %s13, 4
      %s141 = int_to_ptr.hbm [resolvable:$true] %s140
      %s142 = sshll.u32 [#allocation11], 4
      %s143 = int_to_ptr.vmem [resolvable:$true] %s142
      %145 = dma.hbm_to_vmem [thread:$0]  %s141, 16, %s143, [#allocation10]
    $region29: #{tpu_custom_call.1} parent=1 // pred_fallthru
      _
    // Predicated region
    $region30: #{tpu_custom_call.1} parent=1 // pred_check
      _
    $region31: #{tpu_custom_call.1} parent=1 // pred_check_branch
      %147 = sbr.rel (0) target = $region33
    $region32: #{tpu_custom_call.1} parent=1 // pred_region
      %149 = vsyncadd [#allocation13], 0
      %s150 = sshll.u32 %s15, 4
      %s151 = int_to_ptr.hbm [resolvable:$true] %s150
      %s152 = sshll.u32 [#allocation12], 4
      %s153 = int_to_ptr.vmem [resolvable:$true] %s152
      %158 = dma.hbm_to_vmem [thread:$0]  %s151, 384, %s153, [#allocation13], 128, 128, 8
    $region33: #{tpu_custom_call.1} parent=1 // pred_fallthru
      _
    // Predicated region
    $region34: #{tpu_custom_call.1} parent=1 // pred_check
      _
    $region35: #{tpu_custom_call.1} parent=1 // pred_check_branch
      %160 = sbr.rel (0) target = $region37
    $region36: #{tpu_custom_call.1} parent=1 // pred_region
      %162 = vsyncadd [#allocation13], 0
      %s163 = sshll.u32 %s17, 4
      %s164 = int_to_ptr.hbm [resolvable:$true] %s163
      %s165 = sshll.u32 [#allocation14], 4
      %s166 = int_to_ptr.vmem [resolvable:$true] %s165
      %171 = dma.hbm_to_vmem [thread:$0]  %s164, 256, %s166, [#allocation13], 128, 128, 8
    $region37: #{tpu_custom_call.1} parent=1 // pred_fallthru
      _
    // Predicated region
    $region38: #{tpu_custom_call.1} parent=1 // pred_check
      _
    $region39: #{tpu_custom_call.1} parent=1 // pred_check_branch
      %173 = sbr.rel (0) target = $region41
    $region40: #{tpu_custom_call.1} parent=1 // pred_region
      %175 = vsyncadd [#allocation16], 0
      %s177 = sshll.u32 %s19, 4
      %s178 = int_to_ptr.hbm [resolvable:$true] %s177
      %s179 = sshll.u32 [#allocation15], 4
      %s180 = int_to_ptr.vmem [resolvable:$true] %s179
      %182 = dma.hbm_to_vmem [thread:$0]  %s178, 16, %s180, [#allocation16]
    $region41: #{tpu_custom_call.1} parent=1 // pred_fallthru
      _
    // Predicated region
    $region42: #{tpu_custom_call.1} parent=1 // pred_check
      _
    $region43: #{tpu_custom_call.1} parent=1 // pred_check_branch
      %184 = sbr.rel (0) target = $region45
    $region44: #{tpu_custom_call.1} parent=1 // pred_region
      %186 = vsyncadd [#allocation16], 0
      %s187 = sshll.u32 %s21, 4
      %s188 = int_to_ptr.hbm [resolvable:$true] %s187
      %s189 = sshll.u32 [#allocation17], 4
      %s190 = int_to_ptr.vmem [resolvable:$true] %s189
      %195 = dma.hbm_to_vmem [thread:$0]  %s188, 512, %s190, [#allocation16], 128, 128, 8
    $region45: #{tpu_custom_call.1} parent=1 // pred_fallthru
      _
    // Predicated region
    $region46: #{tpu_custom_call.1} parent=1 // pred_check
      _
    $region47: #{tpu_custom_call.1} parent=1 // pred_check_branch
      %197 = sbr.rel (0) target = $region49
    $region48: #{tpu_custom_call.1} parent=1 // pred_region
      %199 = vsyncadd [#allocation19], 0
      %s200 = sshll.u32 %s23, 4
      %s201 = int_to_ptr.hbm [resolvable:$true] %s200
      %s202 = sshll.u32 [#allocation18], 4
      %s203 = int_to_ptr.vmem [resolvable:$true] %s202
      %208 = dma.hbm_to_vmem [thread:$0]  %s201, 512, %s203, [#allocation19], 128, 128, 8
    $region49: #{tpu_custom_call.1} parent=1 // pred_fallthru
      _
    // Predicated region
    $region50: #{tpu_custom_call.1} parent=1 // pred_check
      _
    $region51: #{tpu_custom_call.1} parent=1 // pred_check_branch
      %210 = sbr.rel (0) target = $region53
    $region52: #{tpu_custom_call.1} parent=1 // pred_region
      _
    $region53: #{tpu_custom_call.1} parent=1 // pred_fallthru
      _
    // Predicated region
    $region54: #{tpu_custom_call.1} parent=1 // pred_check
      _
    $region55: #{tpu_custom_call.1} parent=1 // pred_check_branch
      %212 = sbr.rel (0) target = $region57
    $region56: #{tpu_custom_call.1} parent=1 // pred_region
      %214 = vsyncadd [#allocation19], 0
      %s215 = sshll.u32 %s27, 4
      %s216 = int_to_ptr.hbm [resolvable:$true] %s215
      %s217 = sshll.u32 [#allocation20], 4
      %s218 = int_to_ptr.vmem [resolvable:$true] %s217
      %223 = dma.hbm_to_vmem [thread:$0]  %s216, 512, %s218, [#allocation19], 128, 128, 8
    $region57: #{tpu_custom_call.1} parent=1 // pred_fallthru
      _
    // Predicated region
    $region58: #{tpu_custom_call.1} parent=1 // pred_check
      _
    $region59: #{tpu_custom_call.1} parent=1 // pred_check_branch
      %225 = sbr.rel (0) target = $region61
    $region60: #{tpu_custom_call.1} parent=1 // pred_region
      %227 = vsyncadd [#allocation22], 0
      %s228 = sshll.u32 %s29, 4
      %s229 = int_to_ptr.hbm [resolvable:$true] %s228
      %s230 = sshll.u32 [#allocation21], 4
      %s231 = int_to_ptr.vmem [resolvable:$true] %s230
      %236 = dma.hbm_to_vmem [thread:$0]  %s229, 512, %s231, [#allocation22], 128, 128, 8
    $region61: #{tpu_custom_call.1} parent=1 // pred_fallthru
      _
    // Predicated region
    $region62: #{tpu_custom_call.1} parent=1 // pred_check
      _
    $region63: #{tpu_custom_call.1} parent=1 // pred_check_branch
      %238 = sbr.rel (0) target = $region65
    $region64: #{tpu_custom_call.1} parent=1 // pred_region
      _
    $region65: #{tpu_custom_call.1} parent=1 // pred_fallthru
      _
    // Predicated region
    $region66: #{tpu_custom_call.1} parent=1 // pred_check
      _
    $region67: #{tpu_custom_call.1} parent=1 // pred_check_branch
      %240 = sbr.rel (0) target = $region69
    $region68: #{tpu_custom_call.1} parent=1 // pred_region
      %242 = vsyncadd [#allocation22], 0
      %s243 = sshll.u32 %s33, 4
      %s244 = int_to_ptr.hbm [resolvable:$true] %s243
      %s245 = sshll.u32 [#allocation23], 4
      %s246 = int_to_ptr.vmem [resolvable:$true] %s245
      %251 = dma.hbm_to_vmem [thread:$0]  %s244, 512, %s246, [#allocation22], 128, 128, 8
    $region69: #{tpu_custom_call.1} parent=1 // pred_fallthru
      _
    // Predicated region
    $region70: #{tpu_custom_call.1} parent=1 // pred_check
      _
    $region71: #{tpu_custom_call.1} parent=1 // pred_check_branch
      %253 = sbr.rel (0) target = $region73
    $region72: #{tpu_custom_call.1} parent=1 // pred_region
      %255 = vsyncadd [#allocation25], 0
      %s256 = sshll.u32 %s35, 4
      %s257 = int_to_ptr.hbm [resolvable:$true] %s256
      %s258 = sshll.u32 [#allocation24], 4
      %s259 = int_to_ptr.vmem [resolvable:$true] %s258
      %264 = dma.hbm_to_vmem [thread:$0]  %s257, 512, %s259, [#allocation25], 128, 128, 8
    $region73: #{tpu_custom_call.1} parent=1 // pred_fallthru
      _
    // Predicated region
    $region74: #{tpu_custom_call.1} parent=1 // pred_check
      _
    $region75: #{tpu_custom_call.1} parent=1 // pred_check_branch
      %266 = sbr.rel (0) target = $region77
    $region76: #{tpu_custom_call.1} parent=1 // pred_region
      _
    $region77: #{tpu_custom_call.1} parent=1 // pred_fallthru
      _
    // Predicated region
    $region78: #{tpu_custom_call.1} parent=1 // pred_check
      _
    $region79: #{tpu_custom_call.1} parent=1 // pred_check_branch
      %268 = sbr.rel (0) target = $region81
    $region80: #{tpu_custom_call.1} parent=1 // pred_region
      %270 = vsyncadd [#allocation25], 0
      %s271 = sshll.u32 %s39, 4
      %s272 = int_to_ptr.hbm [resolvable:$true] %s271
      %s273 = sshll.u32 [#allocation26], 4
      %s274 = int_to_ptr.vmem [resolvable:$true] %s273
      %279 = dma.hbm_to_vmem [thread:$0]  %s272, 512, %s274, [#allocation25], 128, 128, 8
    $region81: #{tpu_custom_call.1} parent=1 // pred_fallthru
      _
    // Predicated region
    $region82: #{tpu_custom_call.1} parent=1 // pred_check
      _
    $region83: #{tpu_custom_call.1} parent=1 // pred_check_branch
      %281 = sbr.rel (0) target = $region85
    $region84: #{tpu_custom_call.1} parent=1 // pred_region
      %283 = vsyncadd [#allocation28], 0
      %s284 = sshll.u32 %s41, 4
      %s285 = int_to_ptr.hbm [resolvable:$true] %s284
      %s286 = sshll.u32 [#allocation27], 4
      %s287 = int_to_ptr.vmem [resolvable:$true] %s286
      %292 = dma.hbm_to_vmem [thread:$0]  %s285, 512, %s287, [#allocation28], 128, 128, 8
    $region85: #{tpu_custom_call.1} parent=1 // pred_fallthru
      _
    // Predicated region
    $region86: #{tpu_custom_call.1} parent=1 // pred_check
      _
    $region87: #{tpu_custom_call.1} parent=1 // pred_check_branch
      %294 = sbr.rel (0) target = $region89
    $region88: #{tpu_custom_call.1} parent=1 // pred_region
      _
    $region89: #{tpu_custom_call.1} parent=1 // pred_fallthru
      _
    // Predicated region
    $region90: #{tpu_custom_call.1} parent=1 // pred_check
      _
    $region91: #{tpu_custom_call.1} parent=1 // pred_check_branch
      %296 = sbr.rel (0) target = $region93
    $region92: #{tpu_custom_call.1} parent=1 // pred_region
      _
    $region93: #{tpu_custom_call.1} parent=1 // pred_fallthru
      _
    // Predicated region
    $region94: #{tpu_custom_call.1} parent=1 // pred_check
      _
    $region95: #{tpu_custom_call.1} parent=1 // pred_check_branch
      %298 = sbr.rel (0) target = $region97
    $region96: #{tpu_custom_call.1} parent=1 // pred_region
      _
    $region97: #{tpu_custom_call.1} parent=1 // pred_fallthru
      _
    // Predicated region
    $region98: #{tpu_custom_call.1} parent=1 // pred_check
      _
    $region99: #{tpu_custom_call.1} parent=1 // pred_check_branch
      %300 = sbr.rel (0) target = $region101
    $region100: #{tpu_custom_call.1} parent=1 // pred_region
      %302 = vsyncadd [#allocation28], 0
      %s303 = sshll.u32 %s49, 4
      %s304 = int_to_ptr.hbm [resolvable:$true] %s303
      %s305 = sshll.u32 [#allocation29], 4
      %s306 = int_to_ptr.vmem [resolvable:$true] %s305
      %311 = dma.hbm_to_vmem [thread:$0]  %s304, 512, %s306, [#allocation28], 128, 128, 8
    $region101: #{tpu_custom_call.1} parent=1 // pred_fallthru
      _
    // Predicated region
    $region102: #{tpu_custom_call.1} parent=1 // pred_check
      _
    $region103: #{tpu_custom_call.1} parent=1 // pred_check_branch
      %313 = sbr.rel (0) target = $region105
    $region104: #{tpu_custom_call.1} parent=1 // pred_region
      %315 = vsyncadd [#allocation31], 0
      %s316 = sshll.u32 %s51, 4
      %s317 = int_to_ptr.hbm [resolvable:$true] %s316
      %s318 = sshll.u32 [#allocation30], 4
      %s319 = int_to_ptr.vmem [resolvable:$true] %s318
      %324 = dma.hbm_to_vmem [thread:$0]  %s317, 512, %s319, [#allocation31], 128, 128, 8
    $region105: #{tpu_custom_call.1} parent=1 // pred_fallthru
      _
    // Predicated region
    $region106: #{tpu_custom_call.1} parent=1 // pred_check
      _
    $region107: #{tpu_custom_call.1} parent=1 // pred_check_branch
      %326 = sbr.rel (0) target = $region109
    $region108: #{tpu_custom_call.1} parent=1 // pred_region
      _
    $region109: #{tpu_custom_call.1} parent=1 // pred_fallthru
      _
    // Predicated region
    $region110: #{tpu_custom_call.1} parent=1 // pred_check
      _
    $region111: #{tpu_custom_call.1} parent=1 // pred_check_branch
      %328 = sbr.rel (0) target = $region113
    $region112: #{tpu_custom_call.1} parent=1 // pred_region
      _
    $region113: #{tpu_custom_call.1} parent=1 // pred_fallthru
      _
    // Predicated region
    $region114: #{tpu_custom_call.1} parent=1 // pred_check
      _
    $region115: #{tpu_custom_call.1} parent=1 // pred_check_branch
      %330 = sbr.rel (0) target = $region117
    $region116: #{tpu_custom_call.1} parent=1 // pred_region
      _
    $region117: #{tpu_custom_call.1} parent=1 // pred_fallthru
      _
    // Predicated region
    $region118: #{tpu_custom_call.1} parent=1 // pred_check
      _
    $region119: #{tpu_custom_call.1} parent=1 // pred_check_branch
      %332 = sbr.rel (0) target = $region121
    $region120: #{tpu_custom_call.1} parent=1 // pred_region
      %334 = dma.done [#allocation4], 64
    $region121: #{tpu_custom_call.1} parent=1 // pred_fallthru
      _
    // Predicated region
    $region122: #{tpu_custom_call.1} parent=1 // pred_check
      _
    $region123: #{tpu_custom_call.1} parent=1 // pred_check_branch
      %336 = sbr.rel (0) target = $region125
    $region124: #{tpu_custom_call.1} parent=1 // pred_region
      %338 = dma.done [#allocation7], 128
    $region125: #{tpu_custom_call.1} parent=1 // pred_fallthru
      _
    // Predicated region
    $region126: #{tpu_custom_call.1} parent=1 // pred_check
      _
    $region127: #{tpu_custom_call.1} parent=1 // pred_check_branch
      %340 = sbr.rel (0) target = $region129
    $region128: #{tpu_custom_call.1} parent=1 // pred_region
      %342 = dma.done [#allocation7], 256
    $region129: #{tpu_custom_call.1} parent=1 // pred_fallthru
      _
    // Predicated region
    $region130: #{tpu_custom_call.1} parent=1 // pred_check
      _
    $region131: #{tpu_custom_call.1} parent=1 // pred_check_branch
      %344 = sbr.rel (0) target = $region133
    $region132: #{tpu_custom_call.1} parent=1 // pred_region
      %346 = dma.done [#allocation10], 256
    $region133: #{tpu_custom_call.1} parent=1 // pred_fallthru
      _
    // Predicated region
    $region134: #{tpu_custom_call.1} parent=1 // pred_check
      _
    $region135: #{tpu_custom_call.1} parent=1 // pred_check_branch
      %348 = sbr.rel (0) target = $region137
    $region136: #{tpu_custom_call.1} parent=1 // pred_region
      %350 = dma.done [#allocation10], 16
    $region137: #{tpu_custom_call.1} parent=1 // pred_fallthru
      _
    // Predicated region
    $region138: #{tpu_custom_call.1} parent=1 // pred_check
      _
    $region139: #{tpu_custom_call.1} parent=1 // pred_check_branch
      %352 = sbr.rel (0) target = $region141
    $region140: #{tpu_custom_call.1} parent=1 // pred_region
      %354 = dma.done [#allocation13], 384
    $region141: #{tpu_custom_call.1} parent=1 // pred_fallthru
      _
    // Predicated region
    $region142: #{tpu_custom_call.1} parent=1 // pred_check
      _
    $region143: #{tpu_custom_call.1} parent=1 // pred_check_branch
      %356 = sbr.rel (0) target = $region145
    $region144: #{tpu_custom_call.1} parent=1 // pred_region
      %358 = dma.done [#allocation13], 256
    $region145: #{tpu_custom_call.1} parent=1 // pred_fallthru
      _
    // Predicated region
    $region146: #{tpu_custom_call.1} parent=1 // pred_check
      _
    $region147: #{tpu_custom_call.1} parent=1 // pred_check_branch
      %360 = sbr.rel (0) target = $region149
    $region148: #{tpu_custom_call.1} parent=1 // pred_region
      %362 = dma.done [#allocation16], 16
    $region149: #{tpu_custom_call.1} parent=1 // pred_fallthru
      _
    // Predicated region
    $region150: #{tpu_custom_call.1} parent=1 // pred_check
      _
    $region151: #{tpu_custom_call.1} parent=1 // pred_check_branch
      %364 = sbr.rel (0) target = $region153
    $region152: #{tpu_custom_call.1} parent=1 // pred_region
      %366 = dma.done [#allocation16], 512
    $region153: #{tpu_custom_call.1} parent=1 // pred_fallthru
      _
    // Predicated region
    $region154: #{tpu_custom_call.1} parent=1 // pred_check
      _
    $region155: #{tpu_custom_call.1} parent=1 // pred_check_branch
      %368 = sbr.rel (0) target = $region157
    $region156: #{tpu_custom_call.1} parent=1 // pred_region
      %370 = dma.done [#allocation19], 512
    $region157: #{tpu_custom_call.1} parent=1 // pred_fallthru
      _
    // Predicated region
    $region158: #{tpu_custom_call.1} parent=1 // pred_check
      _
    $region159: #{tpu_custom_call.1} parent=1 // pred_check_branch
      %372 = sbr.rel (0) target = $region161
    $region160: #{tpu_custom_call.1} parent=1 // pred_region
      %374 = dma.done [#allocation19], 512
    $region161: #{tpu_custom_call.1} parent=1 // pred_fallthru
      _
    // Predicated region
    $region162: #{tpu_custom_call.1} parent=1 // pred_check
      _
    $region163: #{tpu_custom_call.1} parent=1 // pred_check_branch
      %376 = sbr.rel (0) target = $region165
    $region164: #{tpu_custom_call.1} parent=1 // pred_region
      %378 = dma.done [#allocation22], 512
    $region165: #{tpu_custom_call.1} parent=1 // pred_fallthru
      _
    // Predicated region
    $region166: #{tpu_custom_call.1} parent=1 // pred_check
      _
    $region167: #{tpu_custom_call.1} parent=1 // pred_check_branch
      %380 = sbr.rel (0) target = $region169
    $region168: #{tpu_custom_call.1} parent=1 // pred_region
      %382 = dma.done [#allocation22], 512
    $region169: #{tpu_custom_call.1} parent=1 // pred_fallthru
      _
    // Predicated region
    $region170: #{tpu_custom_call.1} parent=1 // pred_check
      _
    $region171: #{tpu_custom_call.1} parent=1 // pred_check_branch
      %384 = sbr.rel (0) target = $region173
    $region172: #{tpu_custom_call.1} parent=1 // pred_region
      %386 = dma.done [#allocation25], 512
    $region173: #{tpu_custom_call.1} parent=1 // pred_fallthru
      _
    // Predicated region
    $region174: #{tpu_custom_call.1} parent=1 // pred_check
      _
    $region175: #{tpu_custom_call.1} parent=1 // pred_check_branch
      %388 = sbr.rel (0) target = $region177
    $region176: #{tpu_custom_call.1} parent=1 // pred_region
      %390 = dma.done [#allocation25], 512
    $region177: #{tpu_custom_call.1} parent=1 // pred_fallthru
      _
    // Predicated region
    $region178: #{tpu_custom_call.1} parent=1 // pred_check
      _
    $region179: #{tpu_custom_call.1} parent=1 // pred_check_branch
      %392 = sbr.rel (0) target = $region181
    $region180: #{tpu_custom_call.1} parent=1 // pred_region
      %394 = dma.done [#allocation28], 512
    $region181: #{tpu_custom_call.1} parent=1 // pred_fallthru
      _
    // Predicated region
    $region182: #{tpu_custom_call.1} parent=1 // pred_check
      _
    $region183: #{tpu_custom_call.1} parent=1 // pred_check_branch
      %396 = sbr.rel (0) target = $region185
    $region184: #{tpu_custom_call.1} parent=1 // pred_region
      %398 = dma.done [#allocation28], 512
    $region185: #{tpu_custom_call.1} parent=1 // pred_fallthru
      _
    // Predicated region
    $region186: #{tpu_custom_call.1} parent=1 // pred_check
      _
    $region187: #{tpu_custom_call.1} parent=1 // pred_check_branch
      %400 = sbr.rel (0) target = $region189
    $region188: #{tpu_custom_call.1} parent=1 // pred_region
      %402 = dma.done [#allocation31], 512
    $region189: #{tpu_custom_call.1} parent=1 // pred_fallthru
      _
    %v404 = vld [vmem:[%s1] sm:$0xf]
    %v405 = vld [vmem:[%s1 + $0x4] sm:$0xf]
    %v406 = vld [vmem:[#allocation3] sm:$0xf]
    %v407 = vld [vmem:[#allocation6] sm:$0xff]
    %v408 = vld [vmem:[#allocation8] sm:$0xff]
    %v409 = vld [vmem:[#allocation8 + $0x8] sm:$0xff]
    %v410 = vld [vmem:[#allocation12] sm:$0xff]
    %v411 = vld [vmem:[#allocation12 + $0x8] sm:$0xff]
    %v412 = vld [vmem:[#allocation12 + $0x10] sm:$0xff]
    %v413 = vpack.c.bf16 %v409, %v408
    %v414 = vpack.c.bf16 %v411, %v410
    %v415 = vpack.c.bf16 %v412, %v412
    %vm416 = vcmask 195584
    %v418 = vsel %vm416, %v413, 0
    %vm420 = vcmask 1043456
    %v422 = vsel %vm420, %v415, 0
    %424 = vmatpush.bf16.msra.mxu0 0
    %425 = vmatpush.bf16.msra.mxu0 0
    %426 = vmatpush.bf16.msra.mxu0 0
    %427 = vmatpush.bf16.msra.mxu0 0
    %428 = vmatpush.bf16.msra.mxu0 0
    %429 = vmatpush.bf16.msra.mxu0 0
    %430 = vmatpush.bf16.msra.mxu0 %v422
    %431 = vmatpush.bf16.msra.mxu0 %v414
    %432 = vmatmul.bf16.gmra.mxu0 %v418
    %v433 = vpop.f32.mrf.mxu0
    %v434 = vadd.f32 0.0, %v433
    %v435 = vpop.f32.mrf.mxu0
    %v436 = vadd.f32 0.0, %v435
    %437 = vdwg.mxu0
    %v438 = vpack.c.bf16 %v436, %v434
    %v439 = vld [vmem:[#allocation14] sm:$0xff]
    %v440 = vld [vmem:[#allocation14 + $0x8] sm:$0xff]
    %v441 = vpack.c.bf16 %v407, %v407
    %v442 = vpack.c.bf16 %v440, %v439
    %vm443 = vcmask 130048
    %v445 = vsel %vm443, %v441, 0
    %447 = vmatpush.bf16.msra.mxu0 0
    %448 = vmatpush.bf16.msra.mxu0 0
    %449 = vmatpush.bf16.msra.mxu0 0
    %450 = vmatpush.bf16.msra.mxu0 0
    %451 = vmatpush.bf16.msra.mxu0 0
    %452 = vmatpush.bf16.msra.mxu0 0
    %453 = vmatpush.bf16.msra.mxu0 0
    %454 = vmatpush.bf16.msra.mxu0 %v442
    %455 = vmatmul.bf16.gmra.mxu0 %v445
    %v456 = vpop.f32.mrf.mxu0
    %v457 = vadd.f32 0.0, %v456
    %v458 = vpop.f32.mrf.mxu0
    %459 = vdwg.mxu0
    %v461 = vsel %vm443, %v406, 0
    %463 = vmatpush.bf16.msra.mxu0 0
    %464 = vmatpush.bf16.msra.mxu0 0
    %465 = vmatpush.bf16.msra.mxu0 0
    %466 = vmatpush.bf16.msra.mxu0 0
    %467 = vmatpush.bf16.msra.mxu0 0
    %468 = vmatpush.bf16.msra.mxu0 0
    %469 = vmatpush.bf16.msra.mxu0 0
    %470 = vmatpush.bf16.msra.mxu0 %v438
    %471 = vmatmul.bf16.gmra.mxu0 %v461
    %v472 = vpop.f32.mrf.mxu0
    %v473 = vadd.f32 %v457, %v472
    %v474 = vpop.f32.mrf.mxu0
    %475 = vdwg.mxu0
    %v476 = vld [vmem:[#allocation15] sm:$0x1]
    %v478 = vperm.slane %v476, 0
    %v480 = vadd.f32 %v473, %v478
    %v481 = vtanh.pop %v480
    %v482 = vld [vmem:[#allocation9] sm:$0xff]
    %v483 = vld [vmem:[#allocation9 + $0x8] sm:$0xff]
    %v484 = vpack.c.bf16 %v483, %v482
    %485 = vmatpush.bf16.msra.mxu0 0
    %486 = vmatpush.bf16.msra.mxu0 0
    %487 = vmatpush.bf16.msra.mxu0 0
    %488 = vmatpush.bf16.msra.mxu0 0
    %489 = vmatpush.bf16.msra.mxu0 0
    %490 = vmatpush.bf16.msra.mxu0 0
    %491 = vmatpush.bf16.msra.mxu0 0
    %492 = vmatpush.bf16.msra.mxu0 %v484
    %493 = vmatmul.bf16.gmra.mxu0 %v445
    %v494 = vpop.f32.mrf.mxu0
    %v495 = vadd.f32 0.0, %v494
    %v496 = vpop.f32.mrf.mxu0
    %497 = vdwg.mxu0
    %v498 = vpack.c.bf16 %v495, %v495
    %v499 = vld [vmem:[%s11] sm:$0xff]
    %v500 = vld [vmem:[%s11 + $0x8] sm:$0xff]
    %v501 = vld [vmem:[%s11 + $0x10] sm:$0xff]
    %v502 = vpack.c.bf16 %v500, %v499
    %v503 = vpack.c.bf16 %v501, %v501
    %v505 = vsel %vm420, %v503, 0
    %507 = vmatpush.bf16.msra.mxu0 0
    %508 = vmatpush.bf16.msra.mxu0 0
    %509 = vmatpush.bf16.msra.mxu0 0
    %510 = vmatpush.bf16.msra.mxu0 0
    %511 = vmatpush.bf16.msra.mxu0 0
    %512 = vmatpush.bf16.msra.mxu0 0
    %513 = vmatpush.bf16.msra.mxu0 %v505
    %514 = vmatpush.bf16.msra.mxu0 %v502
    %515 = vmatmul.bf16.gmra.mxu0 %v418
    %v516 = vpop.f32.mrf.mxu0
    %v517 = vadd.f32 0.0, %v516
    %v518 = vpop.f32.mrf.mxu0
    %v519 = vadd.f32 0.0, %v518
    %520 = vdwg.mxu0
    %v523 = vunpack.c.l.b16 %v404
    %v524 = vunpack.c.l.b16 %v405
    %v525 = vpack.c.b16 %v524, %v523
    %vm526 = vcmask 64512
    %v528 = vsel %vm526, %v525, 0
    %v531 = vsel %vm420, %v498, 0
    %533 = vmatpush.bf16.msra.mxu0 0
    %534 = vmatpush.bf16.msra.mxu0 0
    %535 = vmatpush.bf16.msra.mxu0 0
    %536 = vmatpush.bf16.msra.mxu0 0
    %537 = vmatpush.bf16.msra.mxu0 0
    %538 = vmatpush.bf16.msra.mxu0 0
    %539 = vmatpush.bf16.msra.mxu0 0
    %540 = vmatpush.bf16.msra.mxu0 %v531
    %541 = vmatmul.bf16.gmra.mxu0 %v528
    %v542 = vpop.f32.mrf.mxu0
    %v543 = vadd.f32 %v517, %v542
    %v544 = vpop.f32.mrf.mxu0
    %v545 = vadd.f32 %v519, %v544
    %546 = vdwg.mxu0
    %v547 = vld [vmem:[#allocation11] sm:$0x1]
    %v549 = vperm.slane %v547, 0
    %v551 = vadd.f32 %v543, %v549
    %v552 = vadd.f32 %v545, %v549
    %v553 = vtanh.pop %v551
    %v554 = vtanh.pop %v552
    %v555 = vld [vmem:[#allocation20] sm:$0xff]
    %v556 = vld [vmem:[#allocation20 + $0x8] sm:$0xff]
    %v557 = vld [vmem:[#allocation20 + $0x10] sm:$0xff]
    %v558 = vld [vmem:[#allocation20 + $0x18] sm:$0xff]
    %v559 = vpack.c.bf16 %v554, %v553
    %v560 = vpack.c.bf16 %v556, %v555
    %v561 = vpack.c.bf16 %v558, %v557
    %vm562 = vcmask 261120
    %v564 = vsel %vm562, %v559, 0
    %566 = vmatpush.bf16.msra.mxu0 0
    %567 = vmatpush.bf16.msra.mxu0 0
    %568 = vmatpush.bf16.msra.mxu0 0
    %569 = vmatpush.bf16.msra.mxu0 0
    %570 = vmatpush.bf16.msra.mxu0 0
    %571 = vmatpush.bf16.msra.mxu0 0
    %572 = vmatpush.bf16.msra.mxu0 %v561
    %573 = vmatpush.bf16.msra.mxu0 %v560
    %574 = vmatmul.bf16.gmra.mxu0 %v564
    %v575 = vpop.f32.mrf.mxu0
    %v576 = vadd.f32 0.0, %v575
    %v577 = vpop.f32.mrf.mxu0
    %v578 = vadd.f32 0.0, %v577
    %579 = vdwg.mxu0
    %v580 = vpack.c.bf16 %v578, %v576
    %v581 = vld [vmem:[#allocation21] sm:$0xff]
    %v582 = vld [vmem:[#allocation21 + $0x8] sm:$0xff]
    %v583 = vld [vmem:[#allocation21 + $0x10] sm:$0xff]
    %v584 = vld [vmem:[#allocation21 + $0x18] sm:$0xff]
    %v585 = vpack.c.bf16 %v481, %v481
    %v586 = vpack.c.bf16 %v582, %v581
    %v587 = vpack.c.bf16 %v584, %v583
    %v589 = vsel %vm562, %v585, 0
    %591 = vmatpush.bf16.msra.mxu0 0
    %592 = vmatpush.bf16.msra.mxu0 0
    %593 = vmatpush.bf16.msra.mxu0 0
    %594 = vmatpush.bf16.msra.mxu0 0
    %595 = vmatpush.bf16.msra.mxu0 0
    %596 = vmatpush.bf16.msra.mxu0 0
    %597 = vmatpush.bf16.msra.mxu0 %v587
    %598 = vmatpush.bf16.msra.mxu0 %v586
    %599 = vmatmul.bf16.gmra.mxu0 %v589
    %v600 = vpop.f32.mrf.mxu0
    %v601 = vadd.f32 0.0, %v600
    %v602 = vpop.f32.mrf.mxu0
    %603 = vdwg.mxu0
    %604 = vmatpush.bf16.msra.mxu0 0
    %605 = vmatpush.bf16.msra.mxu0 0
    %606 = vmatpush.bf16.msra.mxu0 0
    %607 = vmatpush.bf16.msra.mxu0 0
    %608 = vmatpush.bf16.msra.mxu0 0
    %609 = vmatpush.bf16.msra.mxu0 0
    %610 = vmatpush.bf16.msra.mxu0 0
    %611 = vmatpush.bf16.msra.mxu0 %v580
    %612 = vmatmul.bf16.gmra.mxu0 %v461
    %v613 = vpop.f32.mrf.mxu0
    %v614 = vadd.f32 %v601, %v613
    %v615 = vpop.f32.mrf.mxu0
    %616 = vdwg.mxu0
    %v617 = vld [vmem:[%s31] sm:$0x1]
    %v619 = vperm.slane %v617, 0
    %v621 = vadd.f32 %v614, %v619
    %v622 = vtanh.pop %v621
    %v623 = vld [vmem:[#allocation17] sm:$0xff]
    %v624 = vld [vmem:[#allocation17 + $0x8] sm:$0xff]
    %v625 = vld [vmem:[#allocation17 + $0x10] sm:$0xff]
    %v626 = vld [vmem:[#allocation17 + $0x18] sm:$0xff]
    %v627 = vpack.c.bf16 %v624, %v623
    %v628 = vpack.c.bf16 %v626, %v625
    %629 = vmatpush.bf16.msra.mxu0 0
    %630 = vmatpush.bf16.msra.mxu0 0
    %631 = vmatpush.bf16.msra.mxu0 0
    %632 = vmatpush.bf16.msra.mxu0 0
    %633 = vmatpush.bf16.msra.mxu0 0
    %634 = vmatpush.bf16.msra.mxu0 0
    %635 = vmatpush.bf16.msra.mxu0 %v628
    %636 = vmatpush.bf16.msra.mxu0 %v627
    %637 = vmatmul.bf16.gmra.mxu0 %v589
    %v638 = vpop.f32.mrf.mxu0
    %v639 = vadd.f32 0.0, %v638
    %v640 = vpop.f32.mrf.mxu0
    %641 = vdwg.mxu0
    %v642 = vpack.c.bf16 %v639, %v639
    %v643 = vld [vmem:[#allocation18] sm:$0xff]
    %v644 = vld [vmem:[#allocation18 + $0x8] sm:$0xff]
    %v645 = vld [vmem:[#allocation18 + $0x10] sm:$0xff]
    %v646 = vld [vmem:[#allocation18 + $0x18] sm:$0xff]
    %v647 = vpack.c.bf16 %v644, %v643
    %v648 = vpack.c.bf16 %v646, %v645
    %649 = vmatpush.bf16.msra.mxu0 0
    %650 = vmatpush.bf16.msra.mxu0 0
    %651 = vmatpush.bf16.msra.mxu0 0
    %652 = vmatpush.bf16.msra.mxu0 0
    %653 = vmatpush.bf16.msra.mxu0 0
    %654 = vmatpush.bf16.msra.mxu0 0
    %655 = vmatpush.bf16.msra.mxu0 %v648
    %656 = vmatpush.bf16.msra.mxu0 %v647
    %657 = vmatmul.bf16.gmra.mxu0 %v564
    %v658 = vpop.f32.mrf.mxu0
    %v659 = vadd.f32 0.0, %v658
    %v660 = vpop.f32.mrf.mxu0
    %v661 = vadd.f32 0.0, %v660
    %662 = vdwg.mxu0
    %v664 = vsel %vm420, %v642, 0
    %666 = vmatpush.bf16.msra.mxu0 0
    %667 = vmatpush.bf16.msra.mxu0 0
    %668 = vmatpush.bf16.msra.mxu0 0
    %669 = vmatpush.bf16.msra.mxu0 0
    %670 = vmatpush.bf16.msra.mxu0 0
    %671 = vmatpush.bf16.msra.mxu0 0
    %672 = vmatpush.bf16.msra.mxu0 0
    %673 = vmatpush.bf16.msra.mxu0 %v664
    %674 = vmatmul.bf16.gmra.mxu0 %v528
    %v675 = vpop.f32.mrf.mxu0
    %v676 = vadd.f32 %v659, %v675
    %v677 = vpop.f32.mrf.mxu0
    %v678 = vadd.f32 %v661, %v677
    %679 = vdwg.mxu0
    %v680 = vld [vmem:[%s25] sm:$0x1]
    %v682 = vperm.slane %v680, 0
    %v684 = vadd.f32 %v676, %v682
    %v685 = vadd.f32 %v678, %v682
    %v686 = vtanh.pop %v684
    %v687 = vtanh.pop %v685
    %v688 = vpack.c.bf16 %v687, %v686
    %v690 = vsel %vm562, %v688, 0
    %692 = vmatpush.bf16.msra.mxu0 0
    %693 = vmatpush.bf16.msra.mxu0 0
    %694 = vmatpush.bf16.msra.mxu0 0
    %695 = vmatpush.bf16.msra.mxu0 0
    %696 = vmatpush.bf16.msra.mxu0 0
    %697 = vmatpush.bf16.msra.mxu0 0
    %698 = vmatpush.bf16.msra.mxu0 %v561
    %699 = vmatpush.bf16.msra.mxu0 %v560
    %700 = vmatmul.bf16.gmra.mxu0 %v690
    %v701 = vpop.f32.mrf.mxu0
    %v702 = vadd.f32 0.0, %v701
    %v703 = vpop.f32.mrf.mxu0
    %v704 = vadd.f32 0.0, %v703
    %705 = vdwg.mxu0
    %v706 = vpack.c.bf16 %v704, %v702
    %v707 = vpack.c.bf16 %v622, %v622
    %v709 = vsel %vm562, %v707, 0
    %711 = vmatpush.bf16.msra.mxu0 0
    %712 = vmatpush.bf16.msra.mxu0 0
    %713 = vmatpush.bf16.msra.mxu0 0
    %714 = vmatpush.bf16.msra.mxu0 0
    %715 = vmatpush.bf16.msra.mxu0 0
    %716 = vmatpush.bf16.msra.mxu0 0
    %717 = vmatpush.bf16.msra.mxu0 %v587
    %718 = vmatpush.bf16.msra.mxu0 %v586
    %719 = vmatmul.bf16.gmra.mxu0 %v709
    %v720 = vpop.f32.mrf.mxu0
    %v721 = vadd.f32 0.0, %v720
    %v722 = vpop.f32.mrf.mxu0
    %723 = vdwg.mxu0
    %724 = vmatpush.bf16.msra.mxu0 0
    %725 = vmatpush.bf16.msra.mxu0 0
    %726 = vmatpush.bf16.msra.mxu0 0
    %727 = vmatpush.bf16.msra.mxu0 0
    %728 = vmatpush.bf16.msra.mxu0 0
    %729 = vmatpush.bf16.msra.mxu0 0
    %730 = vmatpush.bf16.msra.mxu0 0
    %731 = vmatpush.bf16.msra.mxu0 %v706
    %732 = vmatmul.bf16.gmra.mxu0 %v461
    %v733 = vpop.f32.mrf.mxu0
    %v734 = vadd.f32 %v721, %v733
    %v735 = vpop.f32.mrf.mxu0
    %736 = vdwg.mxu0
    %v737 = vadd.f32 %v734, %v619
    %v738 = vtanh.pop %v737
    %739 = vmatpush.bf16.msra.mxu0 0
    %740 = vmatpush.bf16.msra.mxu0 0
    %741 = vmatpush.bf16.msra.mxu0 0
    %742 = vmatpush.bf16.msra.mxu0 0
    %743 = vmatpush.bf16.msra.mxu0 0
    %744 = vmatpush.bf16.msra.mxu0 0
    %745 = vmatpush.bf16.msra.mxu0 %v628
    %746 = vmatpush.bf16.msra.mxu0 %v627
    %747 = vmatmul.bf16.gmra.mxu0 %v709
    %v748 = vpop.f32.mrf.mxu0
    %v749 = vadd.f32 0.0, %v748
    %v750 = vpop.f32.mrf.mxu0
    %751 = vdwg.mxu0
    %v752 = vpack.c.bf16 %v749, %v749
    %753 = vmatpush.bf16.msra.mxu0 0
    %754 = vmatpush.bf16.msra.mxu0 0
    %755 = vmatpush.bf16.msra.mxu0 0
    %756 = vmatpush.bf16.msra.mxu0 0
    %757 = vmatpush.bf16.msra.mxu0 0
    %758 = vmatpush.bf16.msra.mxu0 0
    %759 = vmatpush.bf16.msra.mxu0 %v648
    %760 = vmatpush.bf16.msra.mxu0 %v647
    %761 = vmatmul.bf16.gmra.mxu0 %v690
    %v762 = vpop.f32.mrf.mxu0
    %v763 = vadd.f32 0.0, %v762
    %v764 = vpop.f32.mrf.mxu0
    %v765 = vadd.f32 0.0, %v764
    %766 = vdwg.mxu0
    %v768 = vsel %vm420, %v752, 0
    %770 = vmatpush.bf16.msra.mxu0 0
    %771 = vmatpush.bf16.msra.mxu0 0
    %772 = vmatpush.bf16.msra.mxu0 0
    %773 = vmatpush.bf16.msra.mxu0 0
    %774 = vmatpush.bf16.msra.mxu0 0
    %775 = vmatpush.bf16.msra.mxu0 0
    %776 = vmatpush.bf16.msra.mxu0 0
    %777 = vmatpush.bf16.msra.mxu0 %v768
    %778 = vmatmul.bf16.gmra.mxu0 %v528
    %v779 = vpop.f32.mrf.mxu0
    %v780 = vadd.f32 %v763, %v779
    %v781 = vpop.f32.mrf.mxu0
    %v782 = vadd.f32 %v765, %v781
    %783 = vdwg.mxu0
    %v784 = vadd.f32 %v780, %v682
    %v785 = vadd.f32 %v782, %v682
    %v786 = vtanh.pop %v784
    %v787 = vtanh.pop %v785
    %v788 = vld [vmem:[#allocation26] sm:$0xff]
    %v789 = vld [vmem:[#allocation26 + $0x8] sm:$0xff]
    %v790 = vld [vmem:[#allocation26 + $0x10] sm:$0xff]
    %v791 = vld [vmem:[#allocation26 + $0x18] sm:$0xff]
    %v792 = vpack.c.bf16 %v787, %v786
    %v793 = vpack.c.bf16 %v789, %v788
    %v794 = vpack.c.bf16 %v791, %v790
    %v796 = vsel %vm562, %v792, 0
    %798 = vmatpush.bf16.msra.mxu0 0
    %799 = vmatpush.bf16.msra.mxu0 0
    %800 = vmatpush.bf16.msra.mxu0 0
    %801 = vmatpush.bf16.msra.mxu0 0
    %802 = vmatpush.bf16.msra.mxu0 0
    %803 = vmatpush.bf16.msra.mxu0 0
    %804 = vmatpush.bf16.msra.mxu0 %v794
    %805 = vmatpush.bf16.msra.mxu0 %v793
    %806 = vmatmul.bf16.gmra.mxu0 %v796
    %v807 = vpop.f32.mrf.mxu0
    %v808 = vadd.f32 0.0, %v807
    %v809 = vpop.f32.mrf.mxu0
    %v810 = vadd.f32 0.0, %v809
    %811 = vdwg.mxu0
    %v812 = vpack.c.bf16 %v810, %v808
    %v813 = vld [vmem:[#allocation27] sm:$0xff]
    %v814 = vld [vmem:[#allocation27 + $0x8] sm:$0xff]
    %v815 = vld [vmem:[#allocation27 + $0x10] sm:$0xff]
    %v816 = vld [vmem:[#allocation27 + $0x18] sm:$0xff]
    %v817 = vpack.c.bf16 %v738, %v738
    %v818 = vpack.c.bf16 %v814, %v813
    %v819 = vpack.c.bf16 %v816, %v815
    %v821 = vsel %vm562, %v817, 0
    %823 = vmatpush.bf16.msra.mxu0 0
    %824 = vmatpush.bf16.msra.mxu0 0
    %825 = vmatpush.bf16.msra.mxu0 0
    %826 = vmatpush.bf16.msra.mxu0 0
    %827 = vmatpush.bf16.msra.mxu0 0
    %828 = vmatpush.bf16.msra.mxu0 0
    %829 = vmatpush.bf16.msra.mxu0 %v819
    %830 = vmatpush.bf16.msra.mxu0 %v818
    %831 = vmatmul.bf16.gmra.mxu0 %v821
    %v832 = vpop.f32.mrf.mxu0
    %v833 = vadd.f32 0.0, %v832
    %v834 = vpop.f32.mrf.mxu0
    %835 = vdwg.mxu0
    %836 = vmatpush.bf16.msra.mxu0 0
    %837 = vmatpush.bf16.msra.mxu0 0
    %838 = vmatpush.bf16.msra.mxu0 0
    %839 = vmatpush.bf16.msra.mxu0 0
    %840 = vmatpush.bf16.msra.mxu0 0
    %841 = vmatpush.bf16.msra.mxu0 0
    %842 = vmatpush.bf16.msra.mxu0 0
    %843 = vmatpush.bf16.msra.mxu0 %v812
    %844 = vmatmul.bf16.gmra.mxu0 %v461
    %v845 = vpop.f32.mrf.mxu0
    %v846 = vadd.f32 %v833, %v845
    %v847 = vpop.f32.mrf.mxu0
    %848 = vdwg.mxu0
    %v849 = vld [vmem:[%s43] sm:$0x1]
    %v851 = vperm.slane %v849, 0
    %v853 = vadd.f32 %v846, %v851
    %v854 = vld [vmem:[#allocation23] sm:$0xff]
    %v855 = vld [vmem:[#allocation23 + $0x8] sm:$0xff]
    %v856 = vld [vmem:[#allocation23 + $0x10] sm:$0xff]
    %v857 = vld [vmem:[#allocation23 + $0x18] sm:$0xff]
    %v858 = vpack.c.bf16 %v855, %v854
    %v859 = vpack.c.bf16 %v857, %v856
    %860 = vmatpush.bf16.msra.mxu0 0
    %861 = vmatpush.bf16.msra.mxu0 0
    %862 = vmatpush.bf16.msra.mxu0 0
    %863 = vmatpush.bf16.msra.mxu0 0
    %864 = vmatpush.bf16.msra.mxu0 0
    %865 = vmatpush.bf16.msra.mxu0 0
    %866 = vmatpush.bf16.msra.mxu0 %v859
    %867 = vmatpush.bf16.msra.mxu0 %v858
    %868 = vmatmul.bf16.gmra.mxu0 %v821
    %v869 = vpop.f32.mrf.mxu0
    %v870 = vadd.f32 0.0, %v869
    %v871 = vpop.f32.mrf.mxu0
    %872 = vdwg.mxu0
    %v873 = vpack.c.bf16 %v870, %v870
    %v874 = vld [vmem:[#allocation24] sm:$0xff]
    %v875 = vld [vmem:[#allocation24 + $0x8] sm:$0xff]
    %v876 = vld [vmem:[#allocation24 + $0x10] sm:$0xff]
    %v877 = vld [vmem:[#allocation24 + $0x18] sm:$0xff]
    %v878 = vpack.c.bf16 %v875, %v874
    %v879 = vpack.c.bf16 %v877, %v876
    %880 = vmatpush.bf16.msra.mxu0 0
    %881 = vmatpush.bf16.msra.mxu0 0
    %882 = vmatpush.bf16.msra.mxu0 0
    %883 = vmatpush.bf16.msra.mxu0 0
    %884 = vmatpush.bf16.msra.mxu0 0
    %885 = vmatpush.bf16.msra.mxu0 0
    %886 = vmatpush.bf16.msra.mxu0 %v879
    %887 = vmatpush.bf16.msra.mxu0 %v878
    %888 = vmatmul.bf16.gmra.mxu0 %v796
    %v889 = vpop.f32.mrf.mxu0
    %v890 = vadd.f32 0.0, %v889
    %v891 = vpop.f32.mrf.mxu0
    %v892 = vadd.f32 0.0, %v891
    %893 = vdwg.mxu0
    %v895 = vsel %vm420, %v873, 0
    %897 = vmatpush.bf16.msra.mxu0 0
    %898 = vmatpush.bf16.msra.mxu0 0
    %899 = vmatpush.bf16.msra.mxu0 0
    %900 = vmatpush.bf16.msra.mxu0 0
    %901 = vmatpush.bf16.msra.mxu0 0
    %902 = vmatpush.bf16.msra.mxu0 0
    %903 = vmatpush.bf16.msra.mxu0 0
    %904 = vmatpush.bf16.msra.mxu0 %v895
    %905 = vmatmul.bf16.gmra.mxu0 %v528
    %v906 = vpop.f32.mrf.mxu0
    %v907 = vadd.f32 %v890, %v906
    %v908 = vpop.f32.mrf.mxu0
    %v909 = vadd.f32 %v892, %v908
    %910 = vdwg.mxu0
    %v911 = vld [vmem:[%s37] sm:$0x1]
    %v913 = vperm.slane %v911, 0
    %v915 = vadd.f32 %v907, %v913
    %v916 = vadd.f32 %v909, %v913
    %917 = vst.msk [vmem:[#allocation32] sm:$0xff] %vm562, %v853
    %918 = vst.msk [vmem:[#allocation33] sm:$0xff] %vm562, %v915
    %919 = vst.msk [vmem:[#allocation33 + $0x8] sm:$0xff] %vm562, %v916
    %v920 = vld [vmem:[%s45] sm:$0xff]
    %v921 = vld [vmem:[%s45 + $0x8] sm:$0xff]
    %v923 = vsel %vm526, %v920, 0
    %v926 = vsel %vm526, %v921, 0
    %928 = vmatpush.msra.mxu0 0.0
    %929 = vmatpush.msra.mxu0 0.0
    %930 = vmatpush.msra.mxu0 0.0
    %931 = vmatpush.msra.mxu0 0.0
    %932 = vmatpush.msra.mxu0 0.0
    %933 = vmatpush.msra.mxu0 0.0
    %934 = vmatpush.msra.mxu0 0.0
    %935 = vmatpush.msra.mxu0 0.0
    %936 = vmatpush.msra.mxu0 0.0
    %937 = vmatpush.msra.mxu0 0.0
    %938 = vmatpush.msra.mxu0 0.0
    %939 = vmatpush.msra.mxu0 0.0
    %940 = vmatpush.msra.mxu0 0.0
    %941 = vmatpush.msra.mxu0 0.0
    %942 = vmatpush.msra.mxu0 0.0
    %943 = vmatpush.msra.mxu0 %v853
    %944 = vmatmul.f32.gmra.mxu0 %v923
    %v945 = vpop.f32.mrf.mxu0
    %v946 = vadd.f32 0.0, %v945
    %947 = vmatmul.f32.gmra.mxu0 %v926
    %v948 = vpop.f32.mrf.mxu0
    %v949 = vadd.f32 0.0, %v948
    %950 = vdwg.mxu0
    %v951 = vld [vmem:[%s47] sm:$0xff]
    %v952 = vld [vmem:[%s47 + $0x8] sm:$0xff]
    %v954 = vsel %vm443, %v951, 0
    %v957 = vsel %vm443, %v952, 0
    %959 = vmatpush.msra.mxu0 0.0
    %960 = vmatpush.msra.mxu0 0.0
    %961 = vmatpush.msra.mxu0 0.0
    %962 = vmatpush.msra.mxu0 0.0
    %963 = vmatpush.msra.mxu0 0.0
    %964 = vmatpush.msra.mxu0 0.0
    %965 = vmatpush.msra.mxu0 0.0
    %966 = vmatpush.msra.mxu0 0.0
    %967 = vmatpush.msra.mxu0 0.0
    %968 = vmatpush.msra.mxu0 0.0
    %969 = vmatpush.msra.mxu0 0.0
    %970 = vmatpush.msra.mxu0 0.0
    %971 = vmatpush.msra.mxu0 0.0
    %972 = vmatpush.msra.mxu0 0.0
    %973 = vmatpush.msra.mxu0 %v916
    %974 = vmatpush.msra.mxu0 %v915
    %975 = vmatmul.f32.gmra.mxu0 %v954
    %v976 = vpop.f32.mrf.mxu0
    %v977 = vadd.f32 0.0, %v976
    %978 = vmatmul.f32.gmra.mxu0 %v957
    %v979 = vpop.f32.mrf.mxu0
    %v980 = vadd.f32 0.0, %v979
    %981 = vdwg.mxu0
    %v982 = vld [vmem:[#allocation29] sm:$0xff]
    %v983 = vld [vmem:[#allocation29 + $0x8] sm:$0xff]
    %v984 = vld [vmem:[#allocation29 + $0x10] sm:$0xff]
    %v985 = vld [vmem:[#allocation29 + $0x18] sm:$0xff]
    %v986 = vpack.c.bf16 %v949, %v946
    %v987 = vpack.c.bf16 %v983, %v982
    %v988 = vpack.c.bf16 %v985, %v984
    %v989 = vld [vmem:[#allocation30] sm:$0xff]
    %v990 = vld [vmem:[#allocation30 + $0x8] sm:$0xff]
    %v991 = vld [vmem:[#allocation30 + $0x10] sm:$0xff]
    %v992 = vld [vmem:[#allocation30 + $0x18] sm:$0xff]
    %v993 = vpack.c.bf16 %v980, %v977
    %v994 = vpack.c.bf16 %v990, %v989
    %v995 = vpack.c.bf16 %v992, %v991
    %v997 = vsel %vm562, %v993, 0
    %999 = vmatpush.bf16.msra.mxu0 0
    %1000 = vmatpush.bf16.msra.mxu0 0
    %1001 = vmatpush.bf16.msra.mxu0 0
    %1002 = vmatpush.bf16.msra.mxu0 0
    %1003 = vmatpush.bf16.msra.mxu0 0
    %1004 = vmatpush.bf16.msra.mxu0 0
    %1005 = vmatpush.bf16.msra.mxu0 %v995
    %1006 = vmatpush.bf16.msra.mxu0 %v994
    %1007 = vmatmul.bf16.gmra.mxu0 %v997
    %v1008 = vpop.f32.mrf.mxu0
    %v1009 = vadd.f32 0.0, %v1008
    %v1010 = vpop.f32.mrf.mxu0
    %v1011 = vadd.f32 0.0, %v1010
    %1012 = vdwg.mxu0
    %v1014 = vsel %vm562, %v986, 0
    %1016 = vmatpush.bf16.msra.mxu0 0
    %1017 = vmatpush.bf16.msra.mxu0 0
    %1018 = vmatpush.bf16.msra.mxu0 0
    %1019 = vmatpush.bf16.msra.mxu0 0
    %1020 = vmatpush.bf16.msra.mxu0 0
    %1021 = vmatpush.bf16.msra.mxu0 0
    %1022 = vmatpush.bf16.msra.mxu0 %v988
    %1023 = vmatpush.bf16.msra.mxu0 %v987
    %1024 = vmatmul.bf16.gmra.mxu0 %v1014
    %v1025 = vpop.f32.mrf.mxu0
    %v1026 = vadd.f32 %v1009, %v1025
    %v1027 = vpop.f32.mrf.mxu0
    %v1028 = vadd.f32 %v1011, %v1027
    %1029 = vdwg.mxu0
    %v1030 = vld [vmem:[%s53] sm:$0x1]
    %v1032 = vperm.slane %v1030, 0
    %v1034 = vadd.f32 %v1026, %v1032
    %v1035 = vadd.f32 %v1028, %v1032
    %v1036 = vmax.f32 %v1034, 0.0
    %v1037 = vmax.f32 %v1035, 0.0
    %v1038 = vld [vmem:[%s55] sm:$0x1]
    %v1040 = vperm.slane %v1038, 0
    %v1042 = vmul.f32 %v1036, %v1040
    %v1043 = vmul.f32 %v1037, %v1040
    %v1044 = vsel %vm562, %v1042, 0.0
    %1045 = vadd.xlane.f32.xlu0 %v1044
    %v1046 = vpop.xlane.xlu0 %1045
    %v1047 = vsel %vm562, %v1043, 0.0
    %1048 = vadd.xlane.f32.xlu0 %v1047
    %v1049 = vpop.xlane.xlu0 %1048
    %v1050 = vld [vmem:[#allocation2] sm:$0x1]
    %v1052 = vperm.slane %v1050, 0
    %v1054 = vadd.f32 %v1046, %v1052
    %v1055 = vadd.f32 %v1049, %v1052
    %vm1056 = vcmask 7168
    %1057 = vst.msk [vmem:[%s63] sm:$0xff] %vm1056, %v1054
    %1058 = vst.msk [vmem:[%s63 + $0x8] sm:$0xff] %vm1056, %v1055
    // Predicated region
    $region190: #{tpu_custom_call.1} parent=1 // pred_check
      _
    $region191: #{tpu_custom_call.1} parent=1 // pred_check_branch
      %1060 = sbr.rel (0) target = $region193
    $region192: #{tpu_custom_call.1} parent=1 // pred_region
      %1062 = vsyncadd [#allocation5], 0
      %s1064 = sshll.u32 [#allocation32], 4
      %s1065 = int_to_ptr.vmem [resolvable:$true] %s1064
      %s1066 = sshll.u32 %s59, 4
      %s1067 = int_to_ptr.hbm [resolvable:$true] %s1066
      %1069 = dma.vmem_to_hbm [thread:$0]  %s1065, 128, %s1067, [#allocation5]
    $region193: #{tpu_custom_call.1} parent=1 // pred_fallthru
      _
    // Predicated region
    $region194: #{tpu_custom_call.1} parent=1 // pred_check
      _
    $region195: #{tpu_custom_call.1} parent=1 // pred_check_branch
      %1071 = sbr.rel (0) target = $region197
    $region196: #{tpu_custom_call.1} parent=1 // pred_region
      %1073 = vsyncadd [#allocation34], 0
      %s1074 = sshll.u32 [#allocation33], 4
      %s1075 = int_to_ptr.vmem [resolvable:$true] %s1074
      %s1076 = sshll.u32 %s61, 4
      %s1077 = int_to_ptr.hbm [resolvable:$true] %s1076
      %1082 = dma.vmem_to_hbm [thread:$0]  %s1075, 256, %s1077, [#allocation34], 128, 128, 8
    $region197: #{tpu_custom_call.1} parent=1 // pred_fallthru
      _
    // Predicated region
    $region198: #{tpu_custom_call.1} parent=1 // pred_check
      _
    $region199: #{tpu_custom_call.1} parent=1 // pred_check_branch
      %1084 = sbr.rel (0) target = $region201
    $region200: #{tpu_custom_call.1} parent=1 // pred_region
      _
    $region201: #{tpu_custom_call.1} parent=1 // pred_fallthru
      _
    // Predicated region
    $region202: #{tpu_custom_call.1} parent=1 // pred_check
      _
    $region203: #{tpu_custom_call.1} parent=1 // pred_check_branch
      %1086 = sbr.rel (0) target = $region205
    $region204: #{tpu_custom_call.1} parent=1 // pred_region
      %1088 = dma.done [#allocation5], 128
    $region205: #{tpu_custom_call.1} parent=1 // pred_fallthru
      _
    // Predicated region
    $region206: #{tpu_custom_call.1} parent=1 // pred_check
      _
    $region207: #{tpu_custom_call.1} parent=1 // pred_check_branch
      %1090 = sbr.rel (0) target = $region209
    $region208: #{tpu_custom_call.1} parent=1 // pred_region
      %1092 = dma.done [#allocation34], 256
    $region209: #{tpu_custom_call.1} parent=1 // pred_fallthru
      _
    // Predicated region
    $region210: #{tpu_custom_call.1} parent=1 // pred_check
      _
    $region211: #{tpu_custom_call.1} parent=1 // pred_check_branch
      %1094 = sbr.rel (0) target = $region213
    $region212: #{tpu_custom_call.1} parent=1 // pred_region
      _
    $region213: #{tpu_custom_call.1} parent=1 // pred_fallthru
      _
    %1095 = vsyncpa [#allocation4], 1
    %1096 = vsyncpa [#allocation7], 1
    %1097 = vsyncpa [#allocation10], 1
    %1098 = vsyncpa [#allocation13], 1
    %1099 = vsyncpa [#allocation16], 1
    %1100 = vsyncpa [#allocation19], 1
    %1101 = vsyncpa [#allocation22], 1
    %1102 = vsyncpa [#allocation25], 1
    %1103 = vsyncpa [#allocation28], 1
    %1104 = vsyncpa [#allocation31], 1
    %1105 = vsyncpa [#allocation5], 1
    %1106 = vsyncpa [#allocation34], 1

</llo_original>
